<compile_context>
chip_gen: v7x
topology: tpu7x:2x2x1
jax: 0.10.0
libtpu: 0.0.40
codegen_flags: <defaults>
</compile_context>

<pallas_src>
import jax
import jax.numpy as jnp
from jax.experimental import pallas as pl
from jax.experimental.pallas import tpu as pltpu


def eeg_snn2_kernel(x_ref, w1_ref, b1_ref, th1_ref, dec1_ref,
                    w2_ref, b2_ref, th2_ref, dec2_ref,
                    o_ref, h_scr, s1_scr):
    m, hidden = h_scr.shape            # m = steps * Bt
    bt = o_ref.shape[1]
    cpad = o_ref.shape[2]
    steps = m // bt

    # ---- layer1 (Linear) for ALL (steps * Bt) rows in one MXU matmul ----
    x = x_ref[0]                                                    # (M, Din_p)
    h_scr[...] = (jnp.dot(x, w1_ref[...], preferred_element_type=jnp.float32)
                  + b1_ref[...])                                    # (M, 512)

    # ---- LIF1 scan: elementwise only (layer-2 matmul hoisted out) ----
    # TODO(synk): `sf.LIF` source not provided; implementing standard LIF:
    #   mem = mem * (1/tau) + x, spike = (mem >= thresh), hard reset to 0,
    #   with heterogeneous per-neuron thresh/tau baked at init.
    dec1 = dec1_ref[...]                                            # (1, 512)
    th1 = th1_ref[...]
    mem1 = jnp.zeros((bt, hidden), jnp.float32)
    for t in range(steps):             # static unroll (steps is small & fixed)
        m1 = mem1 * dec1 + h_scr[pl.ds(t * bt, bt), :]              # (Bt, 512)
        s1 = (m1 >= th1).astype(jnp.float32)
        mem1 = m1 * (1.0 - s1)
        s1_scr[pl.ds(t * bt, bt), :] = s1

    # ---- layer2 (Linear) for ALL steps in one MXU matmul ----
    z = (jnp.dot(s1_scr[...], w2_ref[...], preferred_element_type=jnp.float32)
         + b2_ref[...])                                             # (M, C_p)

    # ---- LIF2 scan + spike accumulation (elementwise) ----
    dec2 = dec2_ref[...]
    th2 = th2_ref[...]
    mem2 = jnp.zeros((bt, cpad), jnp.float32)
    acc = jnp.zeros((bt, cpad), jnp.float32)
    for t in range(steps):
        m2 = mem2 * dec2 + z[t * bt:(t + 1) * bt, :]                # (Bt, C_p)
        s2 = (m2 >= th2).astype(jnp.float32)
        mem2 = m2 * (1.0 - s2)
        acc = acc + s2

    # lane-dense (Bt, 128) store; AvgPool/mean done outside the kernel.
    o_ref[0] = acc


def _round_up(n, m):
    return ((n + m - 1) // m) * m


def eeg_snn2_forward(x, params, *, time_windows, P, batch_tile=8):
    """x: (B, T_total, input_size) float32, T_total = steps * time_windows."""
    w1, b1, th1, tau1, w2, b2, th2, tau2 = params
    f32 = jnp.float32
    B, T_total, D = x.shape
    steps = T_total // time_windows
    Din = D * time_windows                      # flatten(2,3) after reshape
    hidden = w1.shape[1]                        # 512 (multiple of 128)
    C = w2.shape[1]
    CP = C // P

    Bt = batch_tile
    B_p = _round_up(B, Bt)
    n_tiles = B_p // Bt                         # >= 2 keeps both v7x TCs busy
    Din_p = _round_up(Din, 128)
    C_p = _round_up(C, 128)
    M = steps * Bt                              # matmul M-dim per grid step

    # --- activations: (B, T, D) -> (n_tiles, steps*Bt, Din_p) with time-major
    #     row order inside each batch tile, so per-step slices are contiguous
    #     sublane-aligned 8-row chunks (all layout plumbing done here in XLA).
    x2 = x.reshape(B, steps, Din).astype(f32)
    x2 = jnp.pad(x2, ((0, B_p - B), (0, 0), (0, Din_p - Din)))
    x2 = x2.reshape(n_tiles, Bt, steps, Din_p).transpose(0, 2, 1, 3)
    x2 = x2.reshape(n_tiles, M, Din_p)

    # --- params (zero-pad; padded class lanes get a huge threshold -> never spike)
    w1p = jnp.pad(w1.astype(f32), ((0, Din_p - Din), (0, 0)))
    b1r = b1.reshape(1, hidden).astype(f32)
    th1r = th1.reshape(1, hidden).astype(f32)
    dec1r = (1.0 / tau1).reshape(1, hidden).astype(f32)

    w2p = jnp.pad(w2.astype(f32), ((0, 0), (0, C_p - C)))
    b2r = jnp.pad(b2.astype(f32), (0, C_p - C)).reshape(1, C_p)
    th2r = jnp.pad(th2.astype(f32), (0, C_p - C),
                   constant_values=1e30).reshape(1, C_p)
    dec2r = jnp.pad((1.0 / tau2).astype(f32), (0, C_p - C),
                    constant_values=1.0).reshape(1, C_p)

    acc = pl.pallas_call(
        eeg_snn2_kernel,
        out_shape=jax.ShapeDtypeStruct((n_tiles, Bt, C_p), f32),
        grid=(n_tiles,),
        in_specs=[
            pl.BlockSpec((1, M, Din_p), lambda i: (i, 0, 0)),     # x
            pl.BlockSpec((Din_p, hidden), lambda i: (0, 0)),      # w1
            pl.BlockSpec((1, hidden), lambda i: (0, 0)),          # b1
            pl.BlockSpec((1, hidden), lambda i: (0, 0)),          # thresh1
            pl.BlockSpec((1, hidden), lambda i: (0, 0)),          # decay1
            pl.BlockSpec((hidden, C_p), lambda i: (0, 0)),        # w2
            pl.BlockSpec((1, C_p), lambda i: (0, 0)),             # b2
            pl.BlockSpec((1, C_p), lambda i: (0, 0)),             # thresh2
            pl.BlockSpec((1, C_p), lambda i: (0, 0)),             # decay2
        ],
        out_specs=pl.BlockSpec((1, Bt, C_p), lambda i: (i, 0, 0)),
        scratch_shapes=[
            pltpu.VMEM((M, hidden), f32),   # h  = layer1 pre-activations (all steps)
            pltpu.VMEM((M, hidden), f32),   # s1 = layer1 spikes (all steps)
        ],
        compiler_params=pltpu.CompilerParams(dimension_semantics=("parallel",)),
    )(x2, w1p, b1r, th1r, dec1r, w2p, b2r, th2r, dec2r)

    # boost: AvgPool1d(P, P) over classes + mean over steps (tiny; plain JAX).
    acc = acc.reshape(B_p, C_p)[:B, :C]
    return acc.reshape(B, CP, P).mean(-1) / steps                   # (B, C//P)


def eeg_snn2_ref(x, params, *, time_windows, P):
    """Pure-JAX reference with identical LIF semantics (for validation)."""
    w1, b1, th1, tau1, w2, b2, th2, tau2 = params
    B, T_total, D = x.shape
    steps = T_total // time_windows
    dec1 = 1.0 / tau1
    dec2 = 1.0 / tau2
    h = x.reshape(B, steps, D * time_windows) @ w1 + b1              # (B, S, 512)
    mem1 = jnp.zeros((B, w1.shape[1]), jnp.float32)
    mem2 = jnp.zeros((B, w2.shape[1]), jnp.float32)
    acc = jnp.zeros((B, w2.shape[1]), jnp.float32)
    for t in range(steps):
        mem1 = mem1 * dec1 + h[:, t, :]
        s1 = (mem1 >= th1).astype(jnp.float32)
        mem1 = mem1 * (1.0 - s1)
        z = s1 @ w2 + b2
        mem2 = mem2 * dec2 + z
        s2 = (mem2 >= th2).astype(jnp.float32)
        mem2 = mem2 * (1.0 - s2)
        acc = acc + s2
    C = w2.shape[1]
    pooled = acc.reshape(B, C // P, P).mean(-1)                      # AvgPool1d(P,P)
    return pooled / steps                                            # mean over steps


def init_params(key, input_size, time_windows, hidden, num_classes,
                thresh=1.0, tau=2.0, hete_th=0.01, hete_tau=0.01):
    Din = input_size * time_windows
    k = jax.random.split(key, 8)
    bound1 = 1.0 / jnp.sqrt(Din)
    bound2 = 1.0 / jnp.sqrt(hidden)
    w1 = jax.random.uniform(k[0], (Din, hidden), jnp.float32, -bound1, bound1)
    b1 = jax.random.uniform(k[1], (hidden,), jnp.float32, -bound1, bound1)
    w2 = jax.random.uniform(k[2], (hidden, num_classes), jnp.float32, -bound2, bound2)
    b2 = jax.random.uniform(k[3], (num_classes,), jnp.float32, -bound2, bound2)
    th1 = thresh + hete_th * jax.random.normal(k[4], (hidden,), jnp.float32)
    tau1 = tau + hete_tau * jax.random.normal(k[5], (hidden,), jnp.float32)
    th2 = thresh + hete_th * jax.random.normal(k[6], (num_classes,), jnp.float32)
    tau2 = tau + hete_tau * jax.random.normal(k[7], (num_classes,), jnp.float32)
    return (w1, b1, th1, tau1, w2, b2, th2, tau2)


if __name__ == "__main__":
    # Shapes consistent with the module's forward:
    #   B=16, input_size=16, time_windows=8, steps=4 (=> seq len 32),
    #   hidden=512 (fixed in module), num_classes=20, P=10 => output (16, 2).
    # B=16 with Bt=8 gives grid=(2,), so both v7x TensorCores get a tile.
    B, input_size, time_windows, steps = 16, 16, 8, 4
    num_classes, P = 20, 10
    hidden = 512

    key = jax.random.PRNGKey(0)
    kx, kp = jax.random.split(key)
    x = jax.random.normal(kx, (B, steps * time_windows, input_size), jnp.float32)
    params = init_params(kp, input_size, time_windows, hidden, num_classes)

    out = eeg_snn2_forward(x, params, time_windows=time_windows, P=P)
    out = jax.block_until_ready(out)

    ref = eeg_snn2_ref(x, params, time_windows=time_windows, P=P)
    assert out.shape == (B, num_classes // P)
    assert jnp.allclose(out, ref, atol=1e-5, rtol=1e-5), (out, ref)
    print("KERNEL_OK")
</pallas_src>

<mosaic_0001>
module attributes {stable_mosaic.version = 11 : i64} {
  func.func @eeg_snn2_kernel(%arg0: i32, %arg1: memref<1x32x128xf32, #tpu.memory_space<vmem>>, %arg2: memref<128x512xf32, #tpu.memory_space<vmem>>, %arg3: memref<1x512xf32, #tpu.memory_space<vmem>>, %arg4: memref<1x512xf32, #tpu.memory_space<vmem>>, %arg5: memref<1x512xf32, #tpu.memory_space<vmem>>, %arg6: memref<512x128xf32, #tpu.memory_space<vmem>>, %arg7: memref<1x128xf32, #tpu.memory_space<vmem>>, %arg8: memref<1x128xf32, #tpu.memory_space<vmem>>, %arg9: memref<1x128xf32, #tpu.memory_space<vmem>>, %arg10: memref<1x8x128xf32, #tpu.memory_space<vmem>>, %arg11: memref<32x512xf32, #tpu.memory_space<vmem>>, %arg12: memref<32x512xf32, #tpu.memory_space<vmem>>) attributes {dimension_semantics = [#tpu.dimension_semantics<parallel>], iteration_bounds = array<i64: 2>, scalar_prefetch = 0 : i64, scratch_operands = 2 : i64, tpu.core_type = #tpu.core_type<tc>, window_params = [{transform_indices = @transform_0, window_bounds = array<i64: 1, 32, 128>}, {pipeline_mode = #tpu.pipeline_mode<synchronous>, transform_indices = @transform_1, window_bounds = array<i64: 128, 512>}, {pipeline_mode = #tpu.pipeline_mode<synchronous>, transform_indices = @transform_2, window_bounds = array<i64: 1, 512>}, {pipeline_mode = #tpu.pipeline_mode<synchronous>, transform_indices = @transform_3, window_bounds = array<i64: 1, 512>}, {pipeline_mode = #tpu.pipeline_mode<synchronous>, transform_indices = @transform_4, window_bounds = array<i64: 1, 512>}, {pipeline_mode = #tpu.pipeline_mode<synchronous>, transform_indices = @transform_5, window_bounds = array<i64: 512, 128>}, {pipeline_mode = #tpu.pipeline_mode<synchronous>, transform_indices = @transform_6, window_bounds = array<i64: 1, 128>}, {pipeline_mode = #tpu.pipeline_mode<synchronous>, transform_indices = @transform_7, window_bounds = array<i64: 1, 128>}, {pipeline_mode = #tpu.pipeline_mode<synchronous>, transform_indices = @transform_8, window_bounds = array<i64: 1, 128>}, {transform_indices = @transform_9, window_bounds = array<i64: 1, 8, 128>}]} {
    %c0 = arith.constant 0 : index
    %c0_0 = arith.constant 0 : index
    %c0_1 = arith.constant 0 : index
    %0 = vector.load %arg1[%c0, %c0_0, %c0_1] : memref<1x32x128xf32, #tpu.memory_space<vmem>>, vector<1x32x128xf32>
    %1 = vector.shape_cast %0 : vector<1x32x128xf32> to vector<32x128xf32>
    %c0_2 = arith.constant 0 : index
    %c0_3 = arith.constant 0 : index
    %2 = vector.load %arg2[%c0_2, %c0_3] : memref<128x512xf32, #tpu.memory_space<vmem>>, vector<128x512xf32>
    %cst = arith.constant dense<0.000000e+00> : vector<32x512xf32>
    %3 = tpu.matmul %1, %2, %cst {dimension_numbers = #tpu.dot_dimension_numbers<[1], [0], [0], [1], [0, 0, 1, 1], [], []>} : vector<32x128xf32>, vector<128x512xf32>, vector<32x512xf32> -> vector<32x512xf32>
    %c0_4 = arith.constant 0 : index
    %c0_5 = arith.constant 0 : index
    %4 = vector.load %arg3[%c0_4, %c0_5] : memref<1x512xf32, #tpu.memory_space<vmem>>, vector<1x512xf32>
    %5 = vector.broadcast %4 : vector<1x512xf32> to vector<32x512xf32>
    %6 = arith.addf %3, %5 : vector<32x512xf32>
    %c0_6 = arith.constant 0 : index
    %c0_7 = arith.constant 0 : index
    %7 = vector.load %arg11[%c0_6, %c0_7] : memref<32x512xf32, #tpu.memory_space<vmem>>, vector<32x512xf32>
    tpu.vector_store %arg11[%c0_6, %c0_7], %6 {strides = array<i32>} : memref<32x512xf32, #tpu.memory_space<vmem>>, vector<32x512xf32>,
    %c0_8 = arith.constant 0 : index
    %c0_9 = arith.constant 0 : index
    %8 = vector.load %arg5[%c0_8, %c0_9] : memref<1x512xf32, #tpu.memory_space<vmem>>, vector<1x512xf32>
    %c0_10 = arith.constant 0 : index
    %c0_11 = arith.constant 0 : index
    %9 = vector.load %arg4[%c0_10, %c0_11] : memref<1x512xf32, #tpu.memory_space<vmem>>, vector<1x512xf32>
    %cst_12 = arith.constant 0.000000e+00 : f32
    %10 = vector.broadcast %cst_12 : f32 to vector<8x512xf32>
    %11 = vector.broadcast %8 : vector<1x512xf32> to vector<8x512xf32>
    %12 = arith.mulf %10, %11 : vector<8x512xf32>
    %c0_13 = arith.constant 0 : index
    %c0_14 = arith.constant 0 : index
    %13 = vector.load %arg11[%c0_13, %c0_14] : memref<32x512xf32, #tpu.memory_space<vmem>>, vector<8x512xf32>
    %14 = arith.addf %12, %13 : vector<8x512xf32>
    %15 = vector.broadcast %9 : vector<1x512xf32> to vector<8x512xf32>
    %16 = arith.cmpf oge, %14, %15 : vector<8x512xf32>
    %17 = arith.extui %16 : vector<8x512xi1> to vector<8x512xi32>
    %18 = arith.sitofp %17 : vector<8x512xi32> to vector<8x512xf32>
    %cst_15 = arith.constant 1.000000e+00 : f32
    %19 = vector.broadcast %cst_15 : f32 to vector<8x512xf32>
    %20 = arith.subf %19, %18 : vector<8x512xf32>
    %21 = arith.mulf %14, %20 : vector<8x512xf32>
    %c0_16 = arith.constant 0 : index
    %c0_17 = arith.constant 0 : index
    %22 = vector.load %arg12[%c0_16, %c0_17] : memref<32x512xf32, #tpu.memory_space<vmem>>, vector<8x512xf32>
    tpu.vector_store %arg12[%c0_16, %c0_17], %18 {strides = array<i32>} : memref<32x512xf32, #tpu.memory_space<vmem>>, vector<8x512xf32>,
    %23 = vector.broadcast %8 : vector<1x512xf32> to vector<8x512xf32>
    %24 = arith.mulf %21, %23 : vector<8x512xf32>
    %c8 = arith.constant 8 : index
    %c0_18 = arith.constant 0 : index
    %25 = vector.load %arg11[%c8, %c0_18] : memref<32x512xf32, #tpu.memory_space<vmem>>, vector<8x512xf32>
    %26 = arith.addf %24, %25 : vector<8x512xf32>
    %27 = vector.broadcast %9 : vector<1x512xf32> to vector<8x512xf32>
    %28 = arith.cmpf oge, %26, %27 : vector<8x512xf32>
    %29 = arith.extui %28 : vector<8x512xi1> to vector<8x512xi32>
    %30 = arith.sitofp %29 : vector<8x512xi32> to vector<8x512xf32>
    %cst_19 = arith.constant 1.000000e+00 : f32
    %31 = vector.broadcast %cst_19 : f32 to vector<8x512xf32>
    %32 = arith.subf %31, %30 : vector<8x512xf32>
    %33 = arith.mulf %26, %32 : vector<8x512xf32>
    %c8_20 = arith.constant 8 : index
    %c0_21 = arith.constant 0 : index
    %34 = vector.load %arg12[%c8_20, %c0_21] : memref<32x512xf32, #tpu.memory_space<vmem>>, vector<8x512xf32>
    tpu.vector_store %arg12[%c8_20, %c0_21], %30 {strides = array<i32>} : memref<32x512xf32, #tpu.memory_space<vmem>>, vector<8x512xf32>,
    %35 = vector.broadcast %8 : vector<1x512xf32> to vector<8x512xf32>
    %36 = arith.mulf %33, %35 : vector<8x512xf32>
    %c16 = arith.constant 16 : index
    %c0_22 = arith.constant 0 : index
    %37 = vector.load %arg11[%c16, %c0_22] : memref<32x512xf32, #tpu.memory_space<vmem>>, vector<8x512xf32>
    %38 = arith.addf %36, %37 : vector<8x512xf32>
    %39 = vector.broadcast %9 : vector<1x512xf32> to vector<8x512xf32>
    %40 = arith.cmpf oge, %38, %39 : vector<8x512xf32>
    %41 = arith.extui %40 : vector<8x512xi1> to vector<8x512xi32>
    %42 = arith.sitofp %41 : vector<8x512xi32> to vector<8x512xf32>
    %cst_23 = arith.constant 1.000000e+00 : f32
    %43 = vector.broadcast %cst_23 : f32 to vector<8x512xf32>
    %44 = arith.subf %43, %42 : vector<8x512xf32>
    %45 = arith.mulf %38, %44 : vector<8x512xf32>
    %c16_24 = arith.constant 16 : index
    %c0_25 = arith.constant 0 : index
    %46 = vector.load %arg12[%c16_24, %c0_25] : memref<32x512xf32, #tpu.memory_space<vmem>>, vector<8x512xf32>
    tpu.vector_store %arg12[%c16_24, %c0_25], %42 {strides = array<i32>} : memref<32x512xf32, #tpu.memory_space<vmem>>, vector<8x512xf32>,
    %47 = vector.broadcast %8 : vector<1x512xf32> to vector<8x512xf32>
    %48 = arith.mulf %45, %47 : vector<8x512xf32>
    %c24 = arith.constant 24 : index
    %c0_26 = arith.constant 0 : index
    %49 = vector.load %arg11[%c24, %c0_26] : memref<32x512xf32, #tpu.memory_space<vmem>>, vector<8x512xf32>
    %50 = arith.addf %48, %49 : vector<8x512xf32>
    %51 = vector.broadcast %9 : vector<1x512xf32> to vector<8x512xf32>
    %52 = arith.cmpf oge, %50, %51 : vector<8x512xf32>
    %53 = arith.extui %52 : vector<8x512xi1> to vector<8x512xi32>
    %54 = arith.sitofp %53 : vector<8x512xi32> to vector<8x512xf32>
    %c24_27 = arith.constant 24 : index
    %c0_28 = arith.constant 0 : index
    %55 = vector.load %arg12[%c24_27, %c0_28] : memref<32x512xf32, #tpu.memory_space<vmem>>, vector<8x512xf32>
    tpu.vector_store %arg12[%c24_27, %c0_28], %54 {strides = array<i32>} : memref<32x512xf32, #tpu.memory_space<vmem>>, vector<8x512xf32>,
    %c0_29 = arith.constant 0 : index
    %c0_30 = arith.constant 0 : index
    %56 = vector.load %arg12[%c0_29, %c0_30] : memref<32x512xf32, #tpu.memory_space<vmem>>, vector<32x512xf32>
    %c0_31 = arith.constant 0 : index
    %c0_32 = arith.constant 0 : index
    %57 = vector.load %arg6[%c0_31, %c0_32] : memref<512x128xf32, #tpu.memory_space<vmem>>, vector<512x128xf32>
    %cst_33 = arith.constant dense<0.000000e+00> : vector<32x128xf32>
    %58 = tpu.matmul %56, %57, %cst_33 {dimension_numbers = #tpu.dot_dimension_numbers<[1], [0], [0], [1], [0, 0, 1, 1], [], []>} : vector<32x512xf32>, vector<512x128xf32>, vector<32x128xf32> -> vector<32x128xf32>
    %c0_34 = arith.constant 0 : index
    %c0_35 = arith.constant 0 : index
    %59 = vector.load %arg7[%c0_34, %c0_35] : memref<1x128xf32, #tpu.memory_space<vmem>>, vector<1x128xf32>
    %60 = vector.broadcast %59 : vector<1x128xf32> to vector<32x128xf32>
    %61 = arith.addf %58, %60 : vector<32x128xf32>
    %c0_36 = arith.constant 0 : index
    %c0_37 = arith.constant 0 : index
    %62 = vector.load %arg9[%c0_36, %c0_37] : memref<1x128xf32, #tpu.memory_space<vmem>>, vector<1x128xf32>
    %c0_38 = arith.constant 0 : index
    %c0_39 = arith.constant 0 : index
    %63 = vector.load %arg8[%c0_38, %c0_39] : memref<1x128xf32, #tpu.memory_space<vmem>>, vector<1x128xf32>
    %cst_40 = arith.constant 0.000000e+00 : f32
    %64 = vector.broadcast %cst_40 : f32 to vector<8x128xf32>
    %cst_41 = arith.constant 0.000000e+00 : f32
    %65 = vector.broadcast %cst_41 : f32 to vector<8x128xf32>
    %66 = vector.broadcast %62 : vector<1x128xf32> to vector<8x128xf32>
    %67 = arith.mulf %64, %66 : vector<8x128xf32>
    %68 = vector.extract_strided_slice %61 {offsets = [0, 0], sizes = [8, 128], strides = [1, 1]} : vector<32x128xf32> to vector<8x128xf32>
    %69 = arith.addf %67, %68 : vector<8x128xf32>
    %70 = vector.broadcast %63 : vector<1x128xf32> to vector<8x128xf32>
    %71 = arith.cmpf oge, %69, %70 : vector<8x128xf32>
    %72 = arith.extui %71 : vector<8x128xi1> to vector<8x128xi32>
    %73 = arith.sitofp %72 : vector<8x128xi32> to vector<8x128xf32>
    %cst_42 = arith.constant 1.000000e+00 : f32
    %74 = vector.broadcast %cst_42 : f32 to vector<8x128xf32>
    %75 = arith.subf %74, %73 : vector<8x128xf32>
    %76 = arith.mulf %69, %75 : vector<8x128xf32>
    %77 = arith.addf %65, %73 : vector<8x128xf32>
    %78 = vector.broadcast %62 : vector<1x128xf32> to vector<8x128xf32>
    %79 = arith.mulf %76, %78 : vector<8x128xf32>
    %80 = vector.extract_strided_slice %61 {offsets = [8, 0], sizes = [8, 128], strides = [1, 1]} : vector<32x128xf32> to vector<8x128xf32>
    %81 = arith.addf %79, %80 : vector<8x128xf32>
    %82 = vector.broadcast %63 : vector<1x128xf32> to vector<8x128xf32>
    %83 = arith.cmpf oge, %81, %82 : vector<8x128xf32>
    %84 = arith.extui %83 : vector<8x128xi1> to vector<8x128xi32>
    %85 = arith.sitofp %84 : vector<8x128xi32> to vector<8x128xf32>
    %cst_43 = arith.constant 1.000000e+00 : f32
    %86 = vector.broadcast %cst_43 : f32 to vector<8x128xf32>
    %87 = arith.subf %86, %85 : vector<8x128xf32>
    %88 = arith.mulf %81, %87 : vector<8x128xf32>
    %89 = arith.addf %77, %85 : vector<8x128xf32>
    %90 = vector.broadcast %62 : vector<1x128xf32> to vector<8x128xf32>
    %91 = arith.mulf %88, %90 : vector<8x128xf32>
    %92 = vector.extract_strided_slice %61 {offsets = [16, 0], sizes = [8, 128], strides = [1, 1]} : vector<32x128xf32> to vector<8x128xf32>
    %93 = arith.addf %91, %92 : vector<8x128xf32>
    %94 = vector.broadcast %63 : vector<1x128xf32> to vector<8x128xf32>
    %95 = arith.cmpf oge, %93, %94 : vector<8x128xf32>
    %96 = arith.extui %95 : vector<8x128xi1> to vector<8x128xi32>
    %97 = arith.sitofp %96 : vector<8x128xi32> to vector<8x128xf32>
    %cst_44 = arith.constant 1.000000e+00 : f32
    %98 = vector.broadcast %cst_44 : f32 to vector<8x128xf32>
    %99 = arith.subf %98, %97 : vector<8x128xf32>
    %100 = arith.mulf %93, %99 : vector<8x128xf32>
    %101 = arith.addf %89, %97 : vector<8x128xf32>
    %102 = vector.broadcast %62 : vector<1x128xf32> to vector<8x128xf32>
    %103 = arith.mulf %100, %102 : vector<8x128xf32>
    %104 = vector.extract_strided_slice %61 {offsets = [24, 0], sizes = [8, 128], strides = [1, 1]} : vector<32x128xf32> to vector<8x128xf32>
    %105 = arith.addf %103, %104 : vector<8x128xf32>
    %106 = vector.broadcast %63 : vector<1x128xf32> to vector<8x128xf32>
    %107 = arith.cmpf oge, %105, %106 : vector<8x128xf32>
    %108 = arith.extui %107 : vector<8x128xi1> to vector<8x128xi32>
    %109 = arith.sitofp %108 : vector<8x128xi32> to vector<8x128xf32>
    %110 = arith.addf %101, %109 : vector<8x128xf32>
    %c0_45 = arith.constant 0 : index
    %c0_46 = arith.constant 0 : index
    %c0_47 = arith.constant 0 : index
    %111 = vector.load %arg10[%c0_45, %c0_46, %c0_47] : memref<1x8x128xf32, #tpu.memory_space<vmem>>, vector<1x8x128xf32>
    %112 = vector.shape_cast %111 : vector<1x8x128xf32> to vector<8x128xf32>
    %113 = vector.shape_cast %110 : vector<8x128xf32> to vector<1x8x128xf32>
    tpu.vector_store %arg10[%c0_45, %c0_46, %c0_47], %113 {strides = array<i32>} : memref<1x8x128xf32, #tpu.memory_space<vmem>>, vector<1x8x128xf32>,
    return
  }
  func.func @transform_0(%arg0: i32) -> (i32, i32, i32) {
    %c0_i32 = arith.constant 0 : i32
    %c0_i32_0 = arith.constant 0 : i32
    %c0_i32_1 = arith.constant 0 : i32
    return %arg0, %c0_i32, %c0_i32_0 : i32, i32, i32
  }
  func.func @transform_1(%arg0: i32) -> (i32, i32) {
    %c0_i32 = arith.constant 0 : i32
    %c0_i32_0 = arith.constant 0 : i32
    %c0_i32_1 = arith.constant 0 : i32
    return %c0_i32, %c0_i32_0 : i32, i32
  }
  func.func @transform_2(%arg0: i32) -> (i32, i32) {
    %c0_i32 = arith.constant 0 : i32
    %c0_i32_0 = arith.constant 0 : i32
    %c0_i32_1 = arith.constant 0 : i32
    return %c0_i32, %c0_i32_0 : i32, i32
  }
  func.func @transform_3(%arg0: i32) -> (i32, i32) {
    %c0_i32 = arith.constant 0 : i32
    %c0_i32_0 = arith.constant 0 : i32
    %c0_i32_1 = arith.constant 0 : i32
    return %c0_i32, %c0_i32_0 : i32, i32
  }
  func.func @transform_4(%arg0: i32) -> (i32, i32) {
    %c0_i32 = arith.constant 0 : i32
    %c0_i32_0 = arith.constant 0 : i32
    %c0_i32_1 = arith.constant 0 : i32
    return %c0_i32, %c0_i32_0 : i32, i32
  }
  func.func @transform_5(%arg0: i32) -> (i32, i32) {
    %c0_i32 = arith.constant 0 : i32
    %c0_i32_0 = arith.constant 0 : i32
    %c0_i32_1 = arith.constant 0 : i32
    return %c0_i32, %c0_i32_0 : i32, i32
  }
  func.func @transform_6(%arg0: i32) -> (i32, i32) {
    %c0_i32 = arith.constant 0 : i32
    %c0_i32_0 = arith.constant 0 : i32
    %c0_i32_1 = arith.constant 0 : i32
    return %c0_i32, %c0_i32_0 : i32, i32
  }
  func.func @transform_7(%arg0: i32) -> (i32, i32) {
    %c0_i32 = arith.constant 0 : i32
    %c0_i32_0 = arith.constant 0 : i32
    %c0_i32_1 = arith.constant 0 : i32
    return %c0_i32, %c0_i32_0 : i32, i32
  }
  func.func @transform_8(%arg0: i32) -> (i32, i32) {
    %c0_i32 = arith.constant 0 : i32
    %c0_i32_0 = arith.constant 0 : i32
    %c0_i32_1 = arith.constant 0 : i32
    return %c0_i32, %c0_i32_0 : i32, i32
  }
  func.func @transform_9(%arg0: i32) -> (i32, i32, i32) {
    %c0_i32 = arith.constant 0 : i32
    %c0_i32_0 = arith.constant 0 : i32
    %c0_i32_1 = arith.constant 0 : i32
    return %arg0, %c0_i32, %c0_i32_0 : i32, i32, i32
  }
}

</mosaic_0001>

<llo_original>
// kernel: tpu_custom_call.1
$region0: #{tpu_custom_call.1}
  #allocation0 [shape = 'u32[]', space=smem, size = 0x4, offset = 0x4, fixed_abs, tag = 'smem constant byte address 0x4 - core index']
  #allocation1 [shape = 'u32[144,128]{1,0:T(1,128)}', space=vmem, size = 0x12000, scoped, tag = 'internal scratch']
  #allocation2 [shape = 'f32[32,512]{1,0:T(8,128)}', space=vmem, size = 0x10000, scoped, tag = 'scratch operand']
  #allocation3 [shape = 'f32[32,512]{1,0:T(8,128)}', space=vmem, size = 0x10000, scoped, tag = 'scratch operand']
  %s0 = inlined_call_operand.hbm [shape: f32[2,32,128], index: 0, kind: input, shape index: {}]
  %s1 = inlined_call_operand.hbm [shape: f32[128,512], index: 1, kind: input, shape index: {}]
  %s2 = inlined_call_operand.vmem [shape: f32[1,512], index: 2, kind: input, shape index: {}]
  %s3 = inlined_call_operand.vmem [shape: f32[1,512], index: 3, kind: input, shape index: {}]
  %s4 = inlined_call_operand.vmem [shape: f32[1,512], index: 4, kind: input, shape index: {}]
  %s5 = inlined_call_operand.hbm [shape: f32[512,128], index: 5, kind: input, shape index: {}]
  %s6 = inlined_call_operand.vmem [shape: f32[1,128], index: 6, kind: input, shape index: {}]
  %s7 = inlined_call_operand.vmem [shape: f32[1,128], index: 7, kind: input, shape index: {}]
  %s8 = inlined_call_operand.vmem [shape: f32[1,128], index: 8, kind: input, shape index: {}]
  %s9 = inlined_call_operand.hbm [shape: f32[2,8,128], index: 9, kind: output, shape index: {}]
  %s10 = sld [smem:[#allocation0]]
  $region81: #{tpu_custom_call.1} parent=0
    _
  %s12 = ssub.s32 1, %s10
  %s13 = scalar_select 0, %s12, %s10
  $region1: #{tpu_custom_call.1} parent=0
    #allocation4 [shape = 'u8[32768]{0}', space=vmem, size = 0x8000, scoped, tag = 'input window, operand 0']
    #allocation5 [shape = 's32[2]{0}', space=sflag, size = 0x8, scoped, tag = 'scoped memory for tpu_custom_call.1']
    #allocation6 [shape = 's32[2]{0}', space=sflag, size = 0x8, scoped, tag = 'scoped memory for tpu_custom_call.1']
    #allocation7 [shape = 'u8[262144]{0}', space=vmem, size = 0x40000, scoped, tag = 'input window, operand 1, single buffered']
    #allocation8 [shape = 's32[1]{0}', space=sflag, size = 0x4, scoped, tag = 'scoped memory for tpu_custom_call.1']
    #allocation9 [shape = 'u8[262144]{0}', space=vmem, size = 0x40000, scoped, tag = 'input window, operand 5, single buffered']
    #allocation10 [shape = 'u8[8192]{0}', space=vmem, size = 0x2000, scoped, tag = 'output window, operand 0']
    %14 = vsyncpa [#allocation5], 0
    %s15 = scalar_lea.sflag [#allocation5], 1
    %16 = vsyncpa %s15, 0
    %17 = vsyncpa [#allocation8], 0
    %18 = vsyncpa [#allocation6], 0
    %s19 = scalar_lea.sflag [#allocation6], 1
    %20 = vsyncpa %s19, 0
    loop: start=0, step=1, limit=4
    $region2: #{tpu_custom_call.1} parent=1 // loop_pre_header
      _
    $region3: #{tpu_custom_call.1} parent=1 // loop_header
      %s22 = sphi 0, %s26
      %p23 = scmp.ge.s32.totalorder %s22, 4
      %s32 = sphi 0, %s34
      %s35 = sphi 0, %s32
      %s36 = sphi 0, %s35
      %s52 = sphi 0, %s36
      %s56 = sphi 0, %s56
      %s58 = sphi 0, %s56
      %s59 = sphi 0, %s58
      %s73 = sphi 0, %s59
      %s77 = sphi 0, %s77
      %s79 = sphi 0, %s77
      %s80 = sphi 0, %s79
      %s94 = sphi 0, %s80
      %s98 = sphi 0, %s98
      %s100 = sphi 0, %s98
      %s101 = sphi 0, %s100
      %s115 = sphi 0, %s101
      %s119 = sphi 0, %s119
      %s121 = sphi 0, %s119
      %s122 = sphi 0, %s121
      %s136 = sphi 0, %s122
      %s140 = sphi 0, %s140
      %s142 = sphi 0, %s140
      %s143 = sphi 0, %s142
      %s157 = sphi 0, %s143
      %s161 = sphi 0, %s161
      %s163 = sphi 0, %s161
      %s164 = sphi 0, %s163
      %s178 = sphi 0, %s164
      %s182 = sphi 0, %s182
      %s184 = sphi 0, %s182
      %s185 = sphi 0, %s184
      %s199 = sphi 0, %s185
      %s203 = sphi 0, %s203
      %s205 = sphi 0, %s203
      %s206 = sphi 0, %s205
      %s220 = sphi 0, %s206
      %s226 = sphi 0, %s228
      %s229 = sphi 0, %s226
      %s230 = sphi 0, %s229
      %s246 = sphi 0, %s230
    $region4: #{tpu_custom_call.1} parent=1 // loop_header_branch
      %25 = sbr.rel (%p23) target = $region8
    $region5: #{tpu_custom_call.1} parent=1 // loop_body
      %s27 = ssub.s32 %s22, 1
      %s28 = ssub.s32 %s22, 2
      %s29 = sadd.s32 %s22, 1
      %s30 = ssub.s32 %s22, %s29
      %p31 = scmp.eq.s32.totalorder %s30, 0
      %s33 = sadd.s32 %s32, 1
      %s34 = scalar_select %p31, %s32, %s33
      %p37 = pneg %p31
      %p38 = scmp.eq.s32.totalorder %s22, 1
      %p39 = por %p37, %p38
      %p40 = scmp.ne.s32.totalorder %s32, %s35
      %p41 = scmp.eq.s32.totalorder %s22, 0
      %p42 = por %p40, %p41
      %p43 = scmp.ne.s32.totalorder %s32, %s35
      %p44 = scmp.eq.s32.totalorder %s27, 1
      %p45 = por %p43, %p44
      %p46 = scmp.ne.s32.totalorder %s35, %s36
      %p47 = scmp.eq.s32.totalorder %s27, 0
      %p48 = por %p46, %p47
      %p49 = scmp.ne.s32.totalorder %s35, %s36
      %p50 = scmp.eq.s32.totalorder %s28, 1
      %p51 = por %p49, %p50
      %p53 = scmp.ne.s32.totalorder %s36, %s52
      %p54 = scmp.eq.s32.totalorder %s28, 0
      %p55 = por %p53, %p54
      %s57 = sadd.s32 %s56, 1
      %p60 = scmp.eq.s32.totalorder %s22, 1
      %p61 = scmp.ne.s32.totalorder %s56, %s58
      %p62 = scmp.eq.s32.totalorder %s22, 0
      %p63 = por %p61, %p62
      %p64 = scmp.ne.s32.totalorder %s56, %s58
      %p65 = scmp.eq.s32.totalorder %s27, 1
      %p66 = por %p64, %p65
      %p67 = scmp.ne.s32.totalorder %s58, %s59
      %p68 = scmp.eq.s32.totalorder %s27, 0
      %p69 = por %p67, %p68
      %p70 = scmp.ne.s32.totalorder %s58, %s59
      %p71 = scmp.eq.s32.totalorder %s28, 1
      %p72 = por %p70, %p71
      %p74 = scmp.ne.s32.totalorder %s59, %s73
      %p75 = scmp.eq.s32.totalorder %s28, 0
      %p76 = por %p74, %p75
      %s78 = sadd.s32 %s77, 1
      %p81 = scmp.eq.s32.totalorder %s22, 1
      %p82 = scmp.ne.s32.totalorder %s77, %s79
      %p83 = scmp.eq.s32.totalorder %s22, 0
      %p84 = por %p82, %p83
      %p85 = scmp.ne.s32.totalorder %s77, %s79
      %p86 = scmp.eq.s32.totalorder %s27, 1
      %p87 = por %p85, %p86
      %p88 = scmp.ne.s32.totalorder %s79, %s80
      %p89 = scmp.eq.s32.totalorder %s27, 0
      %p90 = por %p88, %p89
      %p91 = scmp.ne.s32.totalorder %s79, %s80
      %p92 = scmp.eq.s32.totalorder %s28, 1
      %p93 = por %p91, %p92
      %p95 = scmp.ne.s32.totalorder %s80, %s94
      %p96 = scmp.eq.s32.totalorder %s28, 0
      %p97 = por %p95, %p96
      %s99 = sadd.s32 %s98, 1
      %p102 = scmp.eq.s32.totalorder %s22, 1
      %p103 = scmp.ne.s32.totalorder %s98, %s100
      %p104 = scmp.eq.s32.totalorder %s22, 0
      %p105 = por %p103, %p104
      %p106 = scmp.ne.s32.totalorder %s98, %s100
      %p107 = scmp.eq.s32.totalorder %s27, 1
      %p108 = por %p106, %p107
      %p109 = scmp.ne.s32.totalorder %s100, %s101
      %p110 = scmp.eq.s32.totalorder %s27, 0
      %p111 = por %p109, %p110
      %p112 = scmp.ne.s32.totalorder %s100, %s101
      %p113 = scmp.eq.s32.totalorder %s28, 1
      %p114 = por %p112, %p113
      %p116 = scmp.ne.s32.totalorder %s101, %s115
      %p117 = scmp.eq.s32.totalorder %s28, 0
      %p118 = por %p116, %p117
      %s120 = sadd.s32 %s119, 1
      %p123 = scmp.eq.s32.totalorder %s22, 1
      %p124 = scmp.ne.s32.totalorder %s119, %s121
      %p125 = scmp.eq.s32.totalorder %s22, 0
      %p126 = por %p124, %p125
      %p127 = scmp.ne.s32.totalorder %s119, %s121
      %p128 = scmp.eq.s32.totalorder %s27, 1
      %p129 = por %p127, %p128
      %p130 = scmp.ne.s32.totalorder %s121, %s122
      %p131 = scmp.eq.s32.totalorder %s27, 0
      %p132 = por %p130, %p131
      %p133 = scmp.ne.s32.totalorder %s121, %s122
      %p134 = scmp.eq.s32.totalorder %s28, 1
      %p135 = por %p133, %p134
      %p137 = scmp.ne.s32.totalorder %s122, %s136
      %p138 = scmp.eq.s32.totalorder %s28, 0
      %p139 = por %p137, %p138
      %s141 = sadd.s32 %s140, 1
      %p144 = scmp.eq.s32.totalorder %s22, 1
      %p145 = scmp.ne.s32.totalorder %s140, %s142
      %p146 = scmp.eq.s32.totalorder %s22, 0
      %p147 = por %p145, %p146
      %p148 = scmp.ne.s32.totalorder %s140, %s142
      %p149 = scmp.eq.s32.totalorder %s27, 1
      %p150 = por %p148, %p149
      %p151 = scmp.ne.s32.totalorder %s142, %s143
      %p152 = scmp.eq.s32.totalorder %s27, 0
      %p153 = por %p151, %p152
      %p154 = scmp.ne.s32.totalorder %s142, %s143
      %p155 = scmp.eq.s32.totalorder %s28, 1
      %p156 = por %p154, %p155
      %p158 = scmp.ne.s32.totalorder %s143, %s157
      %p159 = scmp.eq.s32.totalorder %s28, 0
      %p160 = por %p158, %p159
      %s162 = sadd.s32 %s161, 1
      %p165 = scmp.eq.s32.totalorder %s22, 1
      %p166 = scmp.ne.s32.totalorder %s161, %s163
      %p167 = scmp.eq.s32.totalorder %s22, 0
      %p168 = por %p166, %p167
      %p169 = scmp.ne.s32.totalorder %s161, %s163
      %p170 = scmp.eq.s32.totalorder %s27, 1
      %p171 = por %p169, %p170
      %p172 = scmp.ne.s32.totalorder %s163, %s164
      %p173 = scmp.eq.s32.totalorder %s27, 0
      %p174 = por %p172, %p173
      %p175 = scmp.ne.s32.totalorder %s163, %s164
      %p176 = scmp.eq.s32.totalorder %s28, 1
      %p177 = por %p175, %p176
      %p179 = scmp.ne.s32.totalorder %s164, %s178
      %p180 = scmp.eq.s32.totalorder %s28, 0
      %p181 = por %p179, %p180
      %s183 = sadd.s32 %s182, 1
      %p186 = scmp.eq.s32.totalorder %s22, 1
      %p187 = scmp.ne.s32.totalorder %s182, %s184
      %p188 = scmp.eq.s32.totalorder %s22, 0
      %p189 = por %p187, %p188
      %p190 = scmp.ne.s32.totalorder %s182, %s184
      %p191 = scmp.eq.s32.totalorder %s27, 1
      %p192 = por %p190, %p191
      %p193 = scmp.ne.s32.totalorder %s184, %s185
      %p194 = scmp.eq.s32.totalorder %s27, 0
      %p195 = por %p193, %p194
      %p196 = scmp.ne.s32.totalorder %s184, %s185
      %p197 = scmp.eq.s32.totalorder %s28, 1
      %p198 = por %p196, %p197
      %p200 = scmp.ne.s32.totalorder %s185, %s199
      %p201 = scmp.eq.s32.totalorder %s28, 0
      %p202 = por %p200, %p201
      %s204 = sadd.s32 %s203, 1
      %p207 = scmp.eq.s32.totalorder %s22, 1
      %p208 = scmp.ne.s32.totalorder %s203, %s205
      %p209 = scmp.eq.s32.totalorder %s22, 0
      %p210 = por %p208, %p209
      %p211 = scmp.ne.s32.totalorder %s203, %s205
      %p212 = scmp.eq.s32.totalorder %s27, 1
      %p213 = por %p211, %p212
      %p214 = scmp.ne.s32.totalorder %s205, %s206
      %p215 = scmp.eq.s32.totalorder %s27, 0
      %p216 = por %p214, %p215
      %p217 = scmp.ne.s32.totalorder %s205, %s206
      %p218 = scmp.eq.s32.totalorder %s28, 1
      %p219 = por %p217, %p218
      %p221 = scmp.ne.s32.totalorder %s206, %s220
      %p222 = scmp.eq.s32.totalorder %s28, 0
      %p223 = por %p221, %p222
      %s224 = ssub.s32 %s22, %s29
      %p225 = scmp.eq.s32.totalorder %s224, 0
      %s227 = sadd.s32 %s226, 1
      %s228 = scalar_select %p225, %s226, %s227
      %p231 = pneg %p225
      %p232 = scmp.eq.s32.totalorder %s22, 1
      %p233 = por %p231, %p232
      %p234 = scmp.ne.s32.totalorder %s226, %s229
      %p235 = scmp.eq.s32.totalorder %s22, 0
      %p236 = por %p234, %p235
      %p237 = scmp.ne.s32.totalorder %s226, %s229
      %p238 = scmp.eq.s32.totalorder %s27, 1
      %p239 = por %p237, %p238
      %p240 = scmp.ne.s32.totalorder %s229, %s230
      %p241 = scmp.eq.s32.totalorder %s27, 0
      %p242 = por %p240, %p241
      %p243 = scmp.ne.s32.totalorder %s229, %s230
      %p244 = scmp.eq.s32.totalorder %s28, 1
      %p245 = por %p243, %p244
      %p247 = scmp.ne.s32.totalorder %s230, %s246
      %p248 = scmp.eq.s32.totalorder %s28, 0
      %p249 = por %p247, %p248
      %p250 = scmp.le.s32.totalorder 1, %s22
      %p251 = scmp.lt.s32.totalorder %s22, 3
      %p252 = pnand %p250, %p251
      %p253 = pneg %p252
      // Predicated region
      $region9: #{tpu_custom_call.1} parent=5 // pred_check
        _
      $region10: #{tpu_custom_call.1} parent=5 // pred_check_branch
        %255 = sbr.rel (%p252) target = $region12
      $region11: #{tpu_custom_call.1} parent=5 // pred_region
        %s256 = ssub.s32 %s22, 1
        // Predicated region
        $region13: #{tpu_custom_call.1} parent=11 // pred_check
          %p257 = pneg %p69
        $region14: #{tpu_custom_call.1} parent=11 // pred_check_branch
          %259 = sbr.rel (%p257) target = $region16
        $region15: #{tpu_custom_call.1} parent=11 // pred_region
          %s261 = ssub.s32 8192, 8192
          %262 = vsyncadd [#allocation8], %s261
          %s263 = sshll.u32 [#allocation7], 4
          %s264 = int_to_ptr.vmem [resolvable:$true] %s263
          %269 = dma.hbm_to_vmem [thread:$0]  %s1, 8192, %s264, [#allocation8], 512, 512, 32
        $region16: #{tpu_custom_call.1} parent=11 // pred_fallthru
          _
        // Predicated region
        $region17: #{tpu_custom_call.1} parent=11 // pred_check
          %p270 = pneg %p90
        $region18: #{tpu_custom_call.1} parent=11 // pred_check_branch
          %272 = sbr.rel (%p270) target = $region20
        $region19: #{tpu_custom_call.1} parent=11 // pred_region
          _
        $region20: #{tpu_custom_call.1} parent=11 // pred_fallthru
          _
        // Predicated region
        $region21: #{tpu_custom_call.1} parent=11 // pred_check
          %p273 = pneg %p111
        $region22: #{tpu_custom_call.1} parent=11 // pred_check_branch
          %275 = sbr.rel (%p273) target = $region24
        $region23: #{tpu_custom_call.1} parent=11 // pred_region
          _
        $region24: #{tpu_custom_call.1} parent=11 // pred_fallthru
          _
        // Predicated region
        $region25: #{tpu_custom_call.1} parent=11 // pred_check
          %p276 = pneg %p132
        $region26: #{tpu_custom_call.1} parent=11 // pred_check_branch
          %278 = sbr.rel (%p276) target = $region28
        $region27: #{tpu_custom_call.1} parent=11 // pred_region
          _
        $region28: #{tpu_custom_call.1} parent=11 // pred_fallthru
          _
        // Predicated region
        $region29: #{tpu_custom_call.1} parent=11 // pred_check
          %p279 = pneg %p153
        $region30: #{tpu_custom_call.1} parent=11 // pred_check_branch
          %281 = sbr.rel (%p279) target = $region32
        $region31: #{tpu_custom_call.1} parent=11 // pred_region
          %s283 = ssub.s32 8192, 8192
          %284 = vsyncadd [#allocation8], %s283
          %s285 = sshll.u32 [#allocation9], 4
          %s286 = int_to_ptr.vmem [resolvable:$true] %s285
          %291 = dma.hbm_to_vmem [thread:$0]  %s5, 8192, %s286, [#allocation8], 128, 128, 8
        $region32: #{tpu_custom_call.1} parent=11 // pred_fallthru
          _
        // Predicated region
        $region33: #{tpu_custom_call.1} parent=11 // pred_check
          %p292 = pneg %p174
        $region34: #{tpu_custom_call.1} parent=11 // pred_check_branch
          %294 = sbr.rel (%p292) target = $region36
        $region35: #{tpu_custom_call.1} parent=11 // pred_region
          _
        $region36: #{tpu_custom_call.1} parent=11 // pred_fallthru
          _
        // Predicated region
        $region37: #{tpu_custom_call.1} parent=11 // pred_check
          %p295 = pneg %p195
        $region38: #{tpu_custom_call.1} parent=11 // pred_check_branch
          %297 = sbr.rel (%p295) target = $region40
        $region39: #{tpu_custom_call.1} parent=11 // pred_region
          _
        $region40: #{tpu_custom_call.1} parent=11 // pred_fallthru
          _
        // Predicated region
        $region41: #{tpu_custom_call.1} parent=11 // pred_check
          %p298 = pneg %p216
        $region42: #{tpu_custom_call.1} parent=11 // pred_check_branch
          %300 = sbr.rel (%p298) target = $region44
        $region43: #{tpu_custom_call.1} parent=11 // pred_region
          _
        $region44: #{tpu_custom_call.1} parent=11 // pred_fallthru
          _
      $region12: #{tpu_custom_call.1} parent=5 // pred_fallthru
        _
      %p301 = scmp.lt.s32.totalorder %s22, 2
      // Predicated region
      $region45: #{tpu_custom_call.1} parent=5 // pred_check
        %p302 = pneg %p301
      $region46: #{tpu_custom_call.1} parent=5 // pred_check_branch
        %304 = sbr.rel (%p302) target = $region48
      $region47: #{tpu_custom_call.1} parent=5 // pred_region
        // Predicated region
        $region49: #{tpu_custom_call.1} parent=47 // pred_check
          %p305 = pneg %p42
        $region50: #{tpu_custom_call.1} parent=47 // pred_check_branch
          %307 = sbr.rel (%p305) target = $region52
        $region51: #{tpu_custom_call.1} parent=47 // pred_region
          %s308 = sand.u32 %s32, 1
          %s309 = scalar_lea.sflag [#allocation5], %s308
          %s310 = sand.u32 %s32, 1
          %s311 = smul.addr %s310, 32
          %s312 = scalar_lea.vmem [#allocation4], %s311
          %s314 = ssub.s32 512, 512
          %315 = vsyncadd %s309, %s314
          %s316 = smul.addr %s22, 4
          %s317 = smul.addr %s316, 128
          %s318 = scalar_lea.hbm %s0, %s317
          %s319 = sshll.u32 %s312, 4
          %s320 = int_to_ptr.vmem [resolvable:$true] %s319
          %325 = dma.hbm_to_vmem [thread:$0]  %s318, 512, %s320, %s309, 128, 128, 8
        $region52: #{tpu_custom_call.1} parent=47 // pred_fallthru
          _
      $region48: #{tpu_custom_call.1} parent=5 // pred_fallthru
        _
      %p326 = scmp.le.s32.totalorder 1, %s22
      %p327 = scmp.lt.s32.totalorder %s22, 3
      %p328 = pnand %p326, %p327
      %p329 = pneg %p328
      // Predicated region
      $region53: #{tpu_custom_call.1} parent=5 // pred_check
        _
      $region54: #{tpu_custom_call.1} parent=5 // pred_check_branch
        %331 = sbr.rel (%p328) target = $region56
      $region55: #{tpu_custom_call.1} parent=5 // pred_region
        %s332 = ssub.s32 %s22, 1
        %s333 = sand.u32 %s35, 1
        %s334 = scalar_lea.sflag [#allocation5], %s333
        %s335 = sand.u32 %s35, 1
        %s336 = smul.addr %s335, 32
        %s337 = scalar_lea.vmem [#allocation4], %s336
        // Predicated region
        $region57: #{tpu_custom_call.1} parent=55 // pred_check
          %p338 = pneg %p48
        $region58: #{tpu_custom_call.1} parent=55 // pred_check_branch
          %340 = sbr.rel (%p338) target = $region60
        $region59: #{tpu_custom_call.1} parent=55 // pred_region
          %341 = dma.done %s334, 512
        $region60: #{tpu_custom_call.1} parent=55 // pred_fallthru
          _
        // Predicated region
        $region61: #{tpu_custom_call.1} parent=55 // pred_check
          %p342 = pneg %p69
        $region62: #{tpu_custom_call.1} parent=55 // pred_check_branch
          %344 = sbr.rel (%p342) target = $region64
        $region63: #{tpu_custom_call.1} parent=55 // pred_region
          %345 = dma.done [#allocation8], 8192
        $region64: #{tpu_custom_call.1} parent=55 // pred_fallthru
          _
        // Predicated region
        $region65: #{tpu_custom_call.1} parent=55 // pred_check
          %p346 = pneg %p153
        $region66: #{tpu_custom_call.1} parent=55 // pred_check_branch
          %348 = sbr.rel (%p346) target = $region68
        $region67: #{tpu_custom_call.1} parent=55 // pred_region
          %349 = dma.done [#allocation8], 8192
        $region68: #{tpu_custom_call.1} parent=55 // pred_fallthru
          _
        %s350 = sand.u32 %s35, 1
        %s351 = scalar_lea.sflag [#allocation5], %s350
        %s352 = sand.u32 %s35, 1
        %s353 = smul.addr %s352, 32
        %s354 = scalar_lea.vmem [#allocation4], %s353
        %p355 = pneg %p48
        %p356 = pneg %p45
        %p357 = pneg %p69
        %p358 = pneg %p66
        %p359 = pneg %p90
        %p360 = pneg %p87
        %p361 = pneg %p111
        %p362 = pneg %p108
        %p363 = pneg %p132
        %p364 = pneg %p129
        %p365 = pneg %p153
        %p366 = pneg %p150
        %p367 = pneg %p174
        %p368 = pneg %p171
        %p369 = pneg %p195
        %p370 = pneg %p192
        %p371 = pneg %p216
        %p372 = pneg %p213
        %p373 = pneg %p242
        %p374 = pneg %p239
        %s375 = sand.u32 %s229, 1
        %s376 = scalar_lea.sflag [#allocation6], %s375
        %s377 = sand.u32 %s229, 1
        %s378 = smul.addr %s377, 8
        %s379 = scalar_lea.vmem [#allocation10], %s378
        %v380 = vld [vmem:[%s337] sm:$0xff]
        %v381 = vld [vmem:[%s337 + $0x8] sm:$0xff]
        %v382 = vld [vmem:[%s337 + $0x10] sm:$0xff]
        %v383 = vld [vmem:[%s337 + $0x18] sm:$0xff]
        %v384 = vld [vmem:[#allocation7] sm:$0xff]
        %v385 = vld [vmem:[#allocation7 + $0x8] sm:$0xff]
        %v386 = vld [vmem:[#allocation7 + $0x10] sm:$0xff]
        %v387 = vld [vmem:[#allocation7 + $0x18] sm:$0xff]
        %v388 = vld [vmem:[#allocation7 + $0x20] sm:$0xff]
        %v389 = vld [vmem:[#allocation7 + $0x28] sm:$0xff]
        %v390 = vld [vmem:[#allocation7 + $0x30] sm:$0xff]
        %v391 = vld [vmem:[#allocation7 + $0x38] sm:$0xff]
        %v392 = vld [vmem:[#allocation7 + $0x40] sm:$0xff]
        %v393 = vld [vmem:[#allocation7 + $0x48] sm:$0xff]
        %v394 = vld [vmem:[#allocation7 + $0x50] sm:$0xff]
        %v395 = vld [vmem:[#allocation7 + $0x58] sm:$0xff]
        %v396 = vld [vmem:[#allocation7 + $0x60] sm:$0xff]
        %v397 = vld [vmem:[#allocation7 + $0x68] sm:$0xff]
        %v398 = vld [vmem:[#allocation7 + $0x70] sm:$0xff]
        %v399 = vld [vmem:[#allocation7 + $0x78] sm:$0xff]
        %v400 = vld [vmem:[#allocation7 + $0x80] sm:$0xff]
        %v401 = vld [vmem:[#allocation7 + $0x88] sm:$0xff]
        %v402 = vld [vmem:[#allocation7 + $0x90] sm:$0xff]
        %v403 = vld [vmem:[#allocation7 + $0x98] sm:$0xff]
        %v404 = vld [vmem:[#allocation7 + $0xa0] sm:$0xff]
        %v405 = vld [vmem:[#allocation7 + $0xa8] sm:$0xff]
        %v406 = vld [vmem:[#allocation7 + $0xb0] sm:$0xff]
        %v407 = vld [vmem:[#allocation7 + $0xb8] sm:$0xff]
        %v408 = vld [vmem:[#allocation7 + $0xc0] sm:$0xff]
        %v409 = vld [vmem:[#allocation7 + $0xc8] sm:$0xff]
        %v410 = vld [vmem:[#allocation7 + $0xd0] sm:$0xff]
        %v411 = vld [vmem:[#allocation7 + $0xd8] sm:$0xff]
        %v412 = vld [vmem:[#allocation7 + $0xe0] sm:$0xff]
        %v413 = vld [vmem:[#allocation7 + $0xe8] sm:$0xff]
        %v414 = vld [vmem:[#allocation7 + $0xf0] sm:$0xff]
        %v415 = vld [vmem:[#allocation7 + $0xf8] sm:$0xff]
        %v416 = vld [vmem:[#allocation7 + $0x100] sm:$0xff]
        %v417 = vld [vmem:[#allocation7 + $0x108] sm:$0xff]
        %v418 = vld [vmem:[#allocation7 + $0x110] sm:$0xff]
        %v419 = vld [vmem:[#allocation7 + $0x118] sm:$0xff]
        %v420 = vld [vmem:[#allocation7 + $0x120] sm:$0xff]
        %v421 = vld [vmem:[#allocation7 + $0x128] sm:$0xff]
        %v422 = vld [vmem:[#allocation7 + $0x130] sm:$0xff]
        %v423 = vld [vmem:[#allocation7 + $0x138] sm:$0xff]
        %v424 = vld [vmem:[#allocation7 + $0x140] sm:$0xff]
        %v425 = vld [vmem:[#allocation7 + $0x148] sm:$0xff]
        %v426 = vld [vmem:[#allocation7 + $0x150] sm:$0xff]
        %v427 = vld [vmem:[#allocation7 + $0x158] sm:$0xff]
        %v428 = vld [vmem:[#allocation7 + $0x160] sm:$0xff]
        %v429 = vld [vmem:[#allocation7 + $0x168] sm:$0xff]
        %v430 = vld [vmem:[#allocation7 + $0x170] sm:$0xff]
        %v431 = vld [vmem:[#allocation7 + $0x178] sm:$0xff]
        %v432 = vld [vmem:[#allocation7 + $0x180] sm:$0xff]
        %v433 = vld [vmem:[#allocation7 + $0x188] sm:$0xff]
        %v434 = vld [vmem:[#allocation7 + $0x190] sm:$0xff]
        %v435 = vld [vmem:[#allocation7 + $0x198] sm:$0xff]
        %v436 = vld [vmem:[#allocation7 + $0x1a0] sm:$0xff]
        %v437 = vld [vmem:[#allocation7 + $0x1a8] sm:$0xff]
        %v438 = vld [vmem:[#allocation7 + $0x1b0] sm:$0xff]
        %v439 = vld [vmem:[#allocation7 + $0x1b8] sm:$0xff]
        %v440 = vld [vmem:[#allocation7 + $0x1c0] sm:$0xff]
        %v441 = vld [vmem:[#allocation7 + $0x1c8] sm:$0xff]
        %v442 = vld [vmem:[#allocation7 + $0x1d0] sm:$0xff]
        %v443 = vld [vmem:[#allocation7 + $0x1d8] sm:$0xff]
        %v444 = vld [vmem:[#allocation7 + $0x1e0] sm:$0xff]
        %v445 = vld [vmem:[#allocation7 + $0x1e8] sm:$0xff]
        %v446 = vld [vmem:[#allocation7 + $0x1f0] sm:$0xff]
        %v447 = vld [vmem:[#allocation7 + $0x1f8] sm:$0xff]
        %v448 = vld [vmem:[%s2] sm:$0xf]
        %v450 = vlaneseq
        %v451 = vshrl.u32 %v450, 7
        %v452 = vsub.s32 0, %v451
        %v453 = vrot.slane %v448, %v452
        %v454 = vlaneseq
        %v455 = vshrl.u32 %v454, 7
        %v456 = vsub.s32 1, %v455
        %v457 = vrot.slane %v448, %v456
        %v458 = vlaneseq
        %v459 = vshrl.u32 %v458, 7
        %v460 = vsub.s32 2, %v459
        %v461 = vrot.slane %v448, %v460
        %v462 = vlaneseq
        %v463 = vshrl.u32 %v462, 7
        %v464 = vsub.s32 3, %v463
        %v465 = vrot.slane %v448, %v464
        %470 = vmatprep.subr.mxu0 %v385
        %471 = vmatpush1.msra.mxu0 %v384
        %472 = vmatprep.subr.mxu0 %v389
        %473 = vmatpush1.msra.mxu0 %v388
        %474 = vmatprep.subr.mxu0 %v393
        %475 = vmatpush1.msra.mxu0 %v392
        %476 = vmatprep.subr.mxu0 %v397
        %477 = vmatpush1.msra.mxu0 %v396
        %478 = vmatprep.subr.mxu0 %v401
        %479 = vmatpush1.msra.mxu0 %v400
        %480 = vmatprep.subr.mxu0 %v405
        %481 = vmatpush1.msra.mxu0 %v404
        %482 = vmatprep.subr.mxu0 %v409
        %483 = vmatpush1.msra.mxu0 %v408
        %484 = vmatprep.subr.mxu0 %v413
        %485 = vmatpush1.msra.mxu0 %v412
        %486 = vmatprep.subr.mxu0 %v417
        %487 = vmatpush1.msra.mxu0 %v416
        %488 = vmatprep.subr.mxu0 %v421
        %489 = vmatpush1.msra.mxu0 %v420
        %490 = vmatprep.subr.mxu0 %v425
        %491 = vmatpush1.msra.mxu0 %v424
        %492 = vmatprep.subr.mxu0 %v429
        %493 = vmatpush1.msra.mxu0 %v428
        %494 = vmatprep.subr.mxu0 %v433
        %495 = vmatpush1.msra.mxu0 %v432
        %496 = vmatprep.subr.mxu0 %v437
        %497 = vmatpush1.msra.mxu0 %v436
        %498 = vmatprep.subr.mxu0 %v441
        %499 = vmatpush1.msra.mxu0 %v440
        %500 = vmatprep.subr.mxu0 %v445
        %501 = vmatpush1.msra.mxu0 %v444
        %502 = vmatprep.subr.mxu0 0.0
        %503 = vmatpush1.msra.mxu0 0.0
        %504 = vmatprep.subr.mxu0 0.0
        %505 = vmatpush1.msra.mxu0 0.0
        %506 = vmatprep.subr.mxu0 0.0
        %507 = vmatpush1.msra.mxu0 0.0
        %508 = vmatprep.subr.mxu0 0.0
        %509 = vmatpush1.msra.mxu0 0.0
        %510 = vmatprep.subr.mxu0 0.0
        %511 = vmatpush1.msra.mxu0 0.0
        %512 = vmatprep.subr.mxu0 0.0
        %513 = vmatpush1.msra.mxu0 0.0
        %514 = vmatprep.subr.mxu0 0.0
        %515 = vmatpush1.msra.mxu0 0.0
        %516 = vmatprep.subr.mxu0 0.0
        %517 = vmatpush1.msra.mxu0 0.0
        %518 = vmatprep.subr.mxu0 0.0
        %519 = vmatpush1.msra.mxu0 0.0
        %520 = vmatprep.subr.mxu0 0.0
        %521 = vmatpush1.msra.mxu0 0.0
        %522 = vmatprep.subr.mxu0 0.0
        %523 = vmatpush1.msra.mxu0 0.0
        %524 = vmatprep.subr.mxu0 0.0
        %525 = vmatpush1.msra.mxu0 0.0
        %526 = vmatprep.subr.mxu0 0.0
        %527 = vmatpush1.msra.mxu0 0.0
        %528 = vmatprep.subr.mxu0 0.0
        %529 = vmatpush1.msra.mxu0 0.0
        %530 = vmatprep.subr.mxu0 0.0
        %531 = vmatpush1.msra.mxu0 0.0
        %532 = vmatprep.subr.mxu0 0.0
        %533 = vmatpush1.msra.mxu0 0.0
        %534 = vmatprep.mubr.f32.mxu0 0.0
        %535 = vmatmul.mubr.f32.gmra.mrb[0].mxu0 %v380
        %v536 = vpop.f32.mrb[0].mxu0
        %v537 = vadd.f32 %v453, %v536
        %v538 = vpop.f32.mrb[0].mxu0
        %v539 = vadd.f32 %v457, %v538
        %540 = vmatprep.mubr.f32.mxu0 0.0
        %541 = vmatmul.mubr.f32.gmra.mrb[0].mxu0 %v381
        %v542 = vpop.f32.mrb[0].mxu0
        %v543 = vadd.f32 %v453, %v542
        %v544 = vpop.f32.mrb[0].mxu0
        %v545 = vadd.f32 %v457, %v544
        %546 = vmatprep.mubr.f32.mxu0 0.0
        %547 = vmatmul.mubr.f32.gmra.mrb[0].mxu0 %v382
        %v548 = vpop.f32.mrb[0].mxu0
        %v549 = vadd.f32 %v453, %v548
        %v550 = vpop.f32.mrb[0].mxu0
        %v551 = vadd.f32 %v457, %v550
        %552 = vmatprep.mubr.f32.mxu0 0.0
        %553 = vmatmul.mubr.f32.gmra.mrb[0].mxu0 %v383
        %v554 = vpop.f32.mrb[0].mxu0
        %v555 = vadd.f32 %v453, %v554
        %v556 = vpop.f32.mrb[0].mxu0
        %v557 = vadd.f32 %v457, %v556
        %558 = vdwg.mxu0
        %559 = vmatprep.subr.mxu0 %v387
        %560 = vmatpush1.msra.mxu0 %v386
        %561 = vmatprep.subr.mxu0 %v391
        %562 = vmatpush1.msra.mxu0 %v390
        %563 = vmatprep.subr.mxu0 %v395
        %564 = vmatpush1.msra.mxu0 %v394
        %565 = vmatprep.subr.mxu0 %v399
        %566 = vmatpush1.msra.mxu0 %v398
        %567 = vmatprep.subr.mxu0 %v403
        %568 = vmatpush1.msra.mxu0 %v402
        %569 = vmatprep.subr.mxu0 %v407
        %570 = vmatpush1.msra.mxu0 %v406
        %571 = vmatprep.subr.mxu0 %v411
        %572 = vmatpush1.msra.mxu0 %v410
        %573 = vmatprep.subr.mxu0 %v415
        %574 = vmatpush1.msra.mxu0 %v414
        %575 = vmatprep.subr.mxu0 %v419
        %576 = vmatpush1.msra.mxu0 %v418
        %577 = vmatprep.subr.mxu0 %v423
        %578 = vmatpush1.msra.mxu0 %v422
        %579 = vmatprep.subr.mxu0 %v427
        %580 = vmatpush1.msra.mxu0 %v426
        %581 = vmatprep.subr.mxu0 %v431
        %582 = vmatpush1.msra.mxu0 %v430
        %583 = vmatprep.subr.mxu0 %v435
        %584 = vmatpush1.msra.mxu0 %v434
        %585 = vmatprep.subr.mxu0 %v439
        %586 = vmatpush1.msra.mxu0 %v438
        %587 = vmatprep.subr.mxu0 %v443
        %588 = vmatpush1.msra.mxu0 %v442
        %589 = vmatprep.subr.mxu0 %v447
        %590 = vmatpush1.msra.mxu0 %v446
        %591 = vmatprep.subr.mxu0 0.0
        %592 = vmatpush1.msra.mxu0 0.0
        %593 = vmatprep.subr.mxu0 0.0
        %594 = vmatpush1.msra.mxu0 0.0
        %595 = vmatprep.subr.mxu0 0.0
        %596 = vmatpush1.msra.mxu0 0.0
        %597 = vmatprep.subr.mxu0 0.0
        %598 = vmatpush1.msra.mxu0 0.0
        %599 = vmatprep.subr.mxu0 0.0
        %600 = vmatpush1.msra.mxu0 0.0
        %601 = vmatprep.subr.mxu0 0.0
        %602 = vmatpush1.msra.mxu0 0.0
        %603 = vmatprep.subr.mxu0 0.0
        %604 = vmatpush1.msra.mxu0 0.0
        %605 = vmatprep.subr.mxu0 0.0
        %606 = vmatpush1.msra.mxu0 0.0
        %607 = vmatprep.subr.mxu0 0.0
        %608 = vmatpush1.msra.mxu0 0.0
        %609 = vmatprep.subr.mxu0 0.0
        %610 = vmatpush1.msra.mxu0 0.0
        %611 = vmatprep.subr.mxu0 0.0
        %612 = vmatpush1.msra.mxu0 0.0
        %613 = vmatprep.subr.mxu0 0.0
        %614 = vmatpush1.msra.mxu0 0.0
        %615 = vmatprep.subr.mxu0 0.0
        %616 = vmatpush1.msra.mxu0 0.0
        %617 = vmatprep.subr.mxu0 0.0
        %618 = vmatpush1.msra.mxu0 0.0
        %619 = vmatprep.subr.mxu0 0.0
        %620 = vmatpush1.msra.mxu0 0.0
        %621 = vmatprep.subr.mxu0 0.0
        %622 = vmatpush1.msra.mxu0 0.0
        %623 = vmatprep.mubr.f32.mxu0 0.0
        %624 = vmatmul.mubr.f32.gmra.mrb[0].mxu0 %v380
        %v625 = vpop.f32.mrb[0].mxu0
        %v626 = vadd.f32 %v461, %v625
        %v627 = vpop.f32.mrb[0].mxu0
        %v628 = vadd.f32 %v465, %v627
        %629 = vmatprep.mubr.f32.mxu0 0.0
        %630 = vmatmul.mubr.f32.gmra.mrb[0].mxu0 %v381
        %v631 = vpop.f32.mrb[0].mxu0
        %v632 = vadd.f32 %v461, %v631
        %v633 = vpop.f32.mrb[0].mxu0
        %v634 = vadd.f32 %v465, %v633
        %635 = vmatprep.mubr.f32.mxu0 0.0
        %636 = vmatmul.mubr.f32.gmra.mrb[0].mxu0 %v382
        %v637 = vpop.f32.mrb[0].mxu0
        %v638 = vadd.f32 %v461, %v637
        %v639 = vpop.f32.mrb[0].mxu0
        %v640 = vadd.f32 %v465, %v639
        %641 = vmatprep.mubr.f32.mxu0 0.0
        %642 = vmatmul.mubr.f32.gmra.mrb[0].mxu0 %v383
        %v643 = vpop.f32.mrb[0].mxu0
        %v644 = vadd.f32 %v461, %v643
        %v645 = vpop.f32.mrb[0].mxu0
        %v646 = vadd.f32 %v465, %v645
        %647 = vdwg.mxu0
        %648 = vst [vmem:[#allocation2] sm:$0xff] %v537
        %649 = vst [vmem:[#allocation2 + $0x8] sm:$0xff] %v539
        %650 = vst [vmem:[#allocation2 + $0x10] sm:$0xff] %v626
        %651 = vst [vmem:[#allocation2 + $0x18] sm:$0xff] %v628
        %652 = vst [vmem:[#allocation2 + $0x20] sm:$0xff] %v543
        %653 = vst [vmem:[#allocation2 + $0x28] sm:$0xff] %v545
        %654 = vst [vmem:[#allocation2 + $0x30] sm:$0xff] %v632
        %655 = vst [vmem:[#allocation2 + $0x38] sm:$0xff] %v634
        %656 = vst [vmem:[#allocation2 + $0x40] sm:$0xff] %v549
        %657 = vst [vmem:[#allocation2 + $0x48] sm:$0xff] %v551
        %658 = vst [vmem:[#allocation2 + $0x50] sm:$0xff] %v638
        %659 = vst [vmem:[#allocation2 + $0x58] sm:$0xff] %v640
        %660 = vst [vmem:[#allocation2 + $0x60] sm:$0xff] %v555
        %661 = vst [vmem:[#allocation2 + $0x68] sm:$0xff] %v557
        %662 = vst [vmem:[#allocation2 + $0x70] sm:$0xff] %v644
        %663 = vst [vmem:[#allocation2 + $0x78] sm:$0xff] %v646
        %v664 = vld [vmem:[%s4] sm:$0xf]
        %v665 = vld [vmem:[%s3] sm:$0xf]
        %v667 = vlaneseq
        %v668 = vshrl.u32 %v667, 7
        %v669 = vsub.s32 0, %v668
        %v670 = vrot.slane %v664, %v669
        %v671 = vlaneseq
        %v672 = vshrl.u32 %v671, 7
        %v673 = vsub.s32 1, %v672
        %v674 = vrot.slane %v664, %v673
        %v675 = vlaneseq
        %v676 = vshrl.u32 %v675, 7
        %v677 = vsub.s32 2, %v676
        %v678 = vrot.slane %v664, %v677
        %v679 = vlaneseq
        %v680 = vshrl.u32 %v679, 7
        %v681 = vsub.s32 3, %v680
        %v682 = vrot.slane %v664, %v681
        %v687 = vmul.f32 %v670, 0.0
        %v688 = vmul.f32 %v674, 0.0
        %v689 = vmul.f32 %v678, 0.0
        %v690 = vmul.f32 %v682, 0.0
        %v691 = vld [vmem:[#allocation2] sm:$0xff]
        %v692 = vld [vmem:[#allocation2 + $0x8] sm:$0xff]
        %v693 = vld [vmem:[#allocation2 + $0x10] sm:$0xff]
        %v694 = vld [vmem:[#allocation2 + $0x18] sm:$0xff]
        %v695 = vadd.f32 %v687, %v691
        %v696 = vadd.f32 %v688, %v692
        %v697 = vadd.f32 %v689, %v693
        %v698 = vadd.f32 %v690, %v694
        %v700 = vlaneseq
        %v701 = vshrl.u32 %v700, 7
        %v702 = vsub.s32 0, %v701
        %v703 = vrot.slane %v665, %v702
        %v704 = vlaneseq
        %v705 = vshrl.u32 %v704, 7
        %v706 = vsub.s32 1, %v705
        %v707 = vrot.slane %v665, %v706
        %v708 = vlaneseq
        %v709 = vshrl.u32 %v708, 7
        %v710 = vsub.s32 2, %v709
        %v711 = vrot.slane %v665, %v710
        %v712 = vlaneseq
        %v713 = vshrl.u32 %v712, 7
        %v714 = vsub.s32 3, %v713
        %v715 = vrot.slane %v665, %v714
        %vm720 = vcmp.ge.f32.partialorder %v695, %v703
        %vm721 = vcmp.ge.f32.partialorder %v696, %v707
        %vm722 = vcmp.ge.f32.partialorder %v697, %v711
        %vm723 = vcmp.ge.f32.partialorder %v698, %v715
        %v724 = vsel %vm720, 1, 0
        %v725 = vsel %vm721, 1, 0
        %v726 = vsel %vm722, 1, 0
        %v727 = vsel %vm723, 1, 0
        %v728 = vcvt.s32.f32 %v724
        %v729 = vcvt.s32.f32 %v725
        %v730 = vcvt.s32.f32 %v726
        %v731 = vcvt.s32.f32 %v727
        %v732 = vsub.f32 1.0, %v728
        %v733 = vsub.f32 1.0, %v729
        %v734 = vsub.f32 1.0, %v730
        %v735 = vsub.f32 1.0, %v731
        %v736 = vmul.f32 %v695, %v732
        %v737 = vmul.f32 %v696, %v733
        %v738 = vmul.f32 %v697, %v734
        %v739 = vmul.f32 %v698, %v735
        %740 = vst [vmem:[#allocation3] sm:$0xff] %v728
        %741 = vst [vmem:[#allocation3 + $0x8] sm:$0xff] %v729
        %742 = vst [vmem:[#allocation3 + $0x10] sm:$0xff] %v730
        %743 = vst [vmem:[#allocation3 + $0x18] sm:$0xff] %v731
        %v744 = vmul.f32 %v736, %v670
        %v745 = vmul.f32 %v737, %v674
        %v746 = vmul.f32 %v738, %v678
        %v747 = vmul.f32 %v739, %v682
        %v748 = vld [vmem:[#allocation2 + $0x20] sm:$0xff]
        %v749 = vld [vmem:[#allocation2 + $0x28] sm:$0xff]
        %v750 = vld [vmem:[#allocation2 + $0x30] sm:$0xff]
        %v751 = vld [vmem:[#allocation2 + $0x38] sm:$0xff]
        %v752 = vadd.f32 %v744, %v748
        %v753 = vadd.f32 %v745, %v749
        %v754 = vadd.f32 %v746, %v750
        %v755 = vadd.f32 %v747, %v751
        %vm756 = vcmp.ge.f32.partialorder %v752, %v703
        %vm757 = vcmp.ge.f32.partialorder %v753, %v707
        %vm758 = vcmp.ge.f32.partialorder %v754, %v711
        %vm759 = vcmp.ge.f32.partialorder %v755, %v715
        %v760 = vsel %vm756, 1, 0
        %v761 = vsel %vm757, 1, 0
        %v762 = vsel %vm758, 1, 0
        %v763 = vsel %vm759, 1, 0
        %v764 = vcvt.s32.f32 %v760
        %v765 = vcvt.s32.f32 %v761
        %v766 = vcvt.s32.f32 %v762
        %v767 = vcvt.s32.f32 %v763
        %v768 = vsub.f32 1.0, %v764
        %v769 = vsub.f32 1.0, %v765
        %v770 = vsub.f32 1.0, %v766
        %v771 = vsub.f32 1.0, %v767
        %v772 = vmul.f32 %v752, %v768
        %v773 = vmul.f32 %v753, %v769
        %v774 = vmul.f32 %v754, %v770
        %v775 = vmul.f32 %v755, %v771
        %776 = vst [vmem:[#allocation3 + $0x20] sm:$0xff] %v764
        %777 = vst [vmem:[#allocation3 + $0x28] sm:$0xff] %v765
        %778 = vst [vmem:[#allocation3 + $0x30] sm:$0xff] %v766
        %779 = vst [vmem:[#allocation3 + $0x38] sm:$0xff] %v767
        %v780 = vmul.f32 %v772, %v670
        %v781 = vmul.f32 %v773, %v674
        %v782 = vmul.f32 %v774, %v678
        %v783 = vmul.f32 %v775, %v682
        %v784 = vld [vmem:[#allocation2 + $0x40] sm:$0xff]
        %v785 = vld [vmem:[#allocation2 + $0x48] sm:$0xff]
        %v786 = vld [vmem:[#allocation2 + $0x50] sm:$0xff]
        %v787 = vld [vmem:[#allocation2 + $0x58] sm:$0xff]
        %v788 = vadd.f32 %v780, %v784
        %v789 = vadd.f32 %v781, %v785
        %v790 = vadd.f32 %v782, %v786
        %v791 = vadd.f32 %v783, %v787
        %vm792 = vcmp.ge.f32.partialorder %v788, %v703
        %vm793 = vcmp.ge.f32.partialorder %v789, %v707
        %vm794 = vcmp.ge.f32.partialorder %v790, %v711
        %vm795 = vcmp.ge.f32.partialorder %v791, %v715
        %v796 = vsel %vm792, 1, 0
        %v797 = vsel %vm793, 1, 0
        %v798 = vsel %vm794, 1, 0
        %v799 = vsel %vm795, 1, 0
        %v800 = vcvt.s32.f32 %v796
        %v801 = vcvt.s32.f32 %v797
        %v802 = vcvt.s32.f32 %v798
        %v803 = vcvt.s32.f32 %v799
        %v804 = vsub.f32 1.0, %v800
        %v805 = vsub.f32 1.0, %v801
        %v806 = vsub.f32 1.0, %v802
        %v807 = vsub.f32 1.0, %v803
        %v808 = vmul.f32 %v788, %v804
        %v809 = vmul.f32 %v789, %v805
        %v810 = vmul.f32 %v790, %v806
        %v811 = vmul.f32 %v791, %v807
        %812 = vst [vmem:[#allocation3 + $0x40] sm:$0xff] %v800
        %813 = vst [vmem:[#allocation3 + $0x48] sm:$0xff] %v801
        %814 = vst [vmem:[#allocation3 + $0x50] sm:$0xff] %v802
        %815 = vst [vmem:[#allocation3 + $0x58] sm:$0xff] %v803
        %v816 = vmul.f32 %v808, %v670
        %v817 = vmul.f32 %v809, %v674
        %v818 = vmul.f32 %v810, %v678
        %v819 = vmul.f32 %v811, %v682
        %v820 = vld [vmem:[#allocation2 + $0x60] sm:$0xff]
        %v821 = vld [vmem:[#allocation2 + $0x68] sm:$0xff]
        %v822 = vld [vmem:[#allocation2 + $0x70] sm:$0xff]
        %v823 = vld [vmem:[#allocation2 + $0x78] sm:$0xff]
        %v824 = vadd.f32 %v816, %v820
        %v825 = vadd.f32 %v817, %v821
        %v826 = vadd.f32 %v818, %v822
        %v827 = vadd.f32 %v819, %v823
        %vm828 = vcmp.ge.f32.partialorder %v824, %v703
        %vm829 = vcmp.ge.f32.partialorder %v825, %v707
        %vm830 = vcmp.ge.f32.partialorder %v826, %v711
        %vm831 = vcmp.ge.f32.partialorder %v827, %v715
        %v832 = vsel %vm828, 1, 0
        %v833 = vsel %vm829, 1, 0
        %v834 = vsel %vm830, 1, 0
        %v835 = vsel %vm831, 1, 0
        %v836 = vcvt.s32.f32 %v832
        %v837 = vcvt.s32.f32 %v833
        %v838 = vcvt.s32.f32 %v834
        %v839 = vcvt.s32.f32 %v835
        %840 = vst [vmem:[#allocation3 + $0x60] sm:$0xff] %v836
        %841 = vst [vmem:[#allocation3 + $0x68] sm:$0xff] %v837
        %842 = vst [vmem:[#allocation3 + $0x70] sm:$0xff] %v838
        %843 = vst [vmem:[#allocation3 + $0x78] sm:$0xff] %v839
        %v844 = vld [vmem:[#allocation3] sm:$0xff]
        %v845 = vld [vmem:[#allocation3 + $0x8] sm:$0xff]
        %v846 = vld [vmem:[#allocation3 + $0x10] sm:$0xff]
        %v847 = vld [vmem:[#allocation3 + $0x18] sm:$0xff]
        %v848 = vld [vmem:[#allocation3 + $0x20] sm:$0xff]
        %v849 = vld [vmem:[#allocation3 + $0x28] sm:$0xff]
        %v850 = vld [vmem:[#allocation3 + $0x30] sm:$0xff]
        %v851 = vld [vmem:[#allocation3 + $0x38] sm:$0xff]
        %v852 = vld [vmem:[#allocation3 + $0x40] sm:$0xff]
        %v853 = vld [vmem:[#allocation3 + $0x48] sm:$0xff]
        %v854 = vld [vmem:[#allocation3 + $0x50] sm:$0xff]
        %v855 = vld [vmem:[#allocation3 + $0x58] sm:$0xff]
        %v856 = vld [vmem:[#allocation3 + $0x60] sm:$0xff]
        %v857 = vld [vmem:[#allocation3 + $0x68] sm:$0xff]
        %v858 = vld [vmem:[#allocation3 + $0x70] sm:$0xff]
        %v859 = vld [vmem:[#allocation3 + $0x78] sm:$0xff]
        %v860 = vld [vmem:[#allocation9] sm:$0xff]
        %v861 = vld [vmem:[#allocation9 + $0x8] sm:$0xff]
        %v862 = vld [vmem:[#allocation9 + $0x10] sm:$0xff]
        %v863 = vld [vmem:[#allocation9 + $0x18] sm:$0xff]
        %v864 = vld [vmem:[#allocation9 + $0x20] sm:$0xff]
        %v865 = vld [vmem:[#allocation9 + $0x28] sm:$0xff]
        %v866 = vld [vmem:[#allocation9 + $0x30] sm:$0xff]
        %v867 = vld [vmem:[#allocation9 + $0x38] sm:$0xff]
        %v868 = vld [vmem:[#allocation9 + $0x40] sm:$0xff]
        %v869 = vld [vmem:[#allocation9 + $0x48] sm:$0xff]
        %v870 = vld [vmem:[#allocation9 + $0x50] sm:$0xff]
        %v871 = vld [vmem:[#allocation9 + $0x58] sm:$0xff]
        %v872 = vld [vmem:[#allocation9 + $0x60] sm:$0xff]
        %v873 = vld [vmem:[#allocation9 + $0x68] sm:$0xff]
        %v874 = vld [vmem:[#allocation9 + $0x70] sm:$0xff]
        %v875 = vld [vmem:[#allocation9 + $0x78] sm:$0xff]
        %v876 = vld [vmem:[#allocation9 + $0x80] sm:$0xff]
        %v877 = vld [vmem:[#allocation9 + $0x88] sm:$0xff]
        %v878 = vld [vmem:[#allocation9 + $0x90] sm:$0xff]
        %v879 = vld [vmem:[#allocation9 + $0x98] sm:$0xff]
        %v880 = vld [vmem:[#allocation9 + $0xa0] sm:$0xff]
        %v881 = vld [vmem:[#allocation9 + $0xa8] sm:$0xff]
        %v882 = vld [vmem:[#allocation9 + $0xb0] sm:$0xff]
        %v883 = vld [vmem:[#allocation9 + $0xb8] sm:$0xff]
        %v884 = vld [vmem:[#allocation9 + $0xc0] sm:$0xff]
        %v885 = vld [vmem:[#allocation9 + $0xc8] sm:$0xff]
        %v886 = vld [vmem:[#allocation9 + $0xd0] sm:$0xff]
        %v887 = vld [vmem:[#allocation9 + $0xd8] sm:$0xff]
        %v888 = vld [vmem:[#allocation9 + $0xe0] sm:$0xff]
        %v889 = vld [vmem:[#allocation9 + $0xe8] sm:$0xff]
        %v890 = vld [vmem:[#allocation9 + $0xf0] sm:$0xff]
        %v891 = vld [vmem:[#allocation9 + $0xf8] sm:$0xff]
        %v892 = vld [vmem:[#allocation9 + $0x100] sm:$0xff]
        %v893 = vld [vmem:[#allocation9 + $0x108] sm:$0xff]
        %v894 = vld [vmem:[#allocation9 + $0x110] sm:$0xff]
        %v895 = vld [vmem:[#allocation9 + $0x118] sm:$0xff]
        %v896 = vld [vmem:[#allocation9 + $0x120] sm:$0xff]
        %v897 = vld [vmem:[#allocation9 + $0x128] sm:$0xff]
        %v898 = vld [vmem:[#allocation9 + $0x130] sm:$0xff]
        %v899 = vld [vmem:[#allocation9 + $0x138] sm:$0xff]
        %v900 = vld [vmem:[#allocation9 + $0x140] sm:$0xff]
        %v901 = vld [vmem:[#allocation9 + $0x148] sm:$0xff]
        %v902 = vld [vmem:[#allocation9 + $0x150] sm:$0xff]
        %v903 = vld [vmem:[#allocation9 + $0x158] sm:$0xff]
        %v904 = vld [vmem:[#allocation9 + $0x160] sm:$0xff]
        %v905 = vld [vmem:[#allocation9 + $0x168] sm:$0xff]
        %v906 = vld [vmem:[#allocation9 + $0x170] sm:$0xff]
        %v907 = vld [vmem:[#allocation9 + $0x178] sm:$0xff]
        %v908 = vld [vmem:[#allocation9 + $0x180] sm:$0xff]
        %v909 = vld [vmem:[#allocation9 + $0x188] sm:$0xff]
        %v910 = vld [vmem:[#allocation9 + $0x190] sm:$0xff]
        %v911 = vld [vmem:[#allocation9 + $0x198] sm:$0xff]
        %v912 = vld [vmem:[#allocation9 + $0x1a0] sm:$0xff]
        %v913 = vld [vmem:[#allocation9 + $0x1a8] sm:$0xff]
        %v914 = vld [vmem:[#allocation9 + $0x1b0] sm:$0xff]
        %v915 = vld [vmem:[#allocation9 + $0x1b8] sm:$0xff]
        %v916 = vld [vmem:[#allocation9 + $0x1c0] sm:$0xff]
        %v917 = vld [vmem:[#allocation9 + $0x1c8] sm:$0xff]
        %v918 = vld [vmem:[#allocation9 + $0x1d0] sm:$0xff]
        %v919 = vld [vmem:[#allocation9 + $0x1d8] sm:$0xff]
        %v920 = vld [vmem:[#allocation9 + $0x1e0] sm:$0xff]
        %v921 = vld [vmem:[#allocation9 + $0x1e8] sm:$0xff]
        %v922 = vld [vmem:[#allocation9 + $0x1f0] sm:$0xff]
        %v923 = vld [vmem:[#allocation9 + $0x1f8] sm:$0xff]
        %v924 = vld [vmem:[%s6] sm:$0x1]
        %v926 = vlaneseq
        %v927 = vshrl.u32 %v926, 7
        %v928 = vsub.s32 0, %v927
        %v929 = vrot.slane %v924, %v928
        %931 = vmatprep.subr.mxu0 0.0
        %932 = vmatpush1.msra.mxu0 %v860
        %933 = vmatprep.subr.mxu0 0.0
        %934 = vmatpush1.msra.mxu0 %v861
        %935 = vmatprep.subr.mxu0 0.0
        %936 = vmatpush1.msra.mxu0 %v862
        %937 = vmatprep.subr.mxu0 0.0
        %938 = vmatpush1.msra.mxu0 %v863
        %939 = vmatprep.subr.mxu0 0.0
        %940 = vmatpush1.msra.mxu0 %v864
        %941 = vmatprep.subr.mxu0 0.0
        %942 = vmatpush1.msra.mxu0 %v865
        %943 = vmatprep.subr.mxu0 0.0
        %944 = vmatpush1.msra.mxu0 %v866
        %945 = vmatprep.subr.mxu0 0.0
        %946 = vmatpush1.msra.mxu0 %v867
        %947 = vmatprep.subr.mxu0 0.0
        %948 = vmatpush1.msra.mxu0 %v868
        %949 = vmatprep.subr.mxu0 0.0
        %950 = vmatpush1.msra.mxu0 %v869
        %951 = vmatprep.subr.mxu0 0.0
        %952 = vmatpush1.msra.mxu0 %v870
        %953 = vmatprep.subr.mxu0 0.0
        %954 = vmatpush1.msra.mxu0 %v871
        %955 = vmatprep.subr.mxu0 0.0
        %956 = vmatpush1.msra.mxu0 %v872
        %957 = vmatprep.subr.mxu0 0.0
        %958 = vmatpush1.msra.mxu0 %v873
        %959 = vmatprep.subr.mxu0 0.0
        %960 = vmatpush1.msra.mxu0 %v874
        %961 = vmatprep.subr.mxu0 0.0
        %962 = vmatpush1.msra.mxu0 %v875
        %963 = vmatprep.subr.mxu0 0.0
        %964 = vmatpush1.msra.mxu0 %v876
        %965 = vmatprep.subr.mxu0 0.0
        %966 = vmatpush1.msra.mxu0 %v877
        %967 = vmatprep.subr.mxu0 0.0
        %968 = vmatpush1.msra.mxu0 %v878
        %969 = vmatprep.subr.mxu0 0.0
        %970 = vmatpush1.msra.mxu0 %v879
        %971 = vmatprep.subr.mxu0 0.0
        %972 = vmatpush1.msra.mxu0 %v880
        %973 = vmatprep.subr.mxu0 0.0
        %974 = vmatpush1.msra.mxu0 %v881
        %975 = vmatprep.subr.mxu0 0.0
        %976 = vmatpush1.msra.mxu0 %v882
        %977 = vmatprep.subr.mxu0 0.0
        %978 = vmatpush1.msra.mxu0 %v883
        %979 = vmatprep.subr.mxu0 0.0
        %980 = vmatpush1.msra.mxu0 %v884
        %981 = vmatprep.subr.mxu0 0.0
        %982 = vmatpush1.msra.mxu0 %v885
        %983 = vmatprep.subr.mxu0 0.0
        %984 = vmatpush1.msra.mxu0 %v886
        %985 = vmatprep.subr.mxu0 0.0
        %986 = vmatpush1.msra.mxu0 %v887
        %987 = vmatprep.subr.mxu0 0.0
        %988 = vmatpush1.msra.mxu0 %v888
        %989 = vmatprep.subr.mxu0 0.0
        %990 = vmatpush1.msra.mxu0 %v889
        %991 = vmatprep.subr.mxu0 0.0
        %992 = vmatpush1.msra.mxu0 %v890
        %993 = vmatprep.subr.mxu0 0.0
        %994 = vmatpush1.msra.mxu0 %v891
        %995 = vmatprep.mubr.f32.mxu0 %v845
        %996 = vmatmul.mubr.f32.gmra.mrb[0].mxu0 %v844
        %v997 = vpop.f32.mrb[0].mxu0
        %v998 = vadd.f32 %v929, %v997
        %v999 = vpop.f32.mrb[0].mxu0
        %1000 = vmatprep.mubr.f32.mxu0 %v849
        %1001 = vmatmul.mubr.f32.gmra.mrb[0].mxu0 %v848
        %v1002 = vpop.f32.mrb[0].mxu0
        %v1003 = vadd.f32 %v929, %v1002
        %v1004 = vpop.f32.mrb[0].mxu0
        %1005 = vmatprep.mubr.f32.mxu0 %v853
        %1006 = vmatmul.mubr.f32.gmra.mrb[0].mxu0 %v852
        %v1007 = vpop.f32.mrb[0].mxu0
        %v1008 = vadd.f32 %v929, %v1007
        %v1009 = vpop.f32.mrb[0].mxu0
        %1010 = vmatprep.mubr.f32.mxu0 %v857
        %1011 = vmatmul.mubr.f32.gmra.mrb[0].mxu0 %v856
        %v1012 = vpop.f32.mrb[0].mxu0
        %v1013 = vadd.f32 %v929, %v1012
        %v1014 = vpop.f32.mrb[0].mxu0
        %1015 = vdwg.mxu0
        %1016 = vmatprep.subr.mxu0 0.0
        %1017 = vmatpush1.msra.mxu0 %v892
        %1018 = vmatprep.subr.mxu0 0.0
        %1019 = vmatpush1.msra.mxu0 %v893
        %1020 = vmatprep.subr.mxu0 0.0
        %1021 = vmatpush1.msra.mxu0 %v894
        %1022 = vmatprep.subr.mxu0 0.0
        %1023 = vmatpush1.msra.mxu0 %v895
        %1024 = vmatprep.subr.mxu0 0.0
        %1025 = vmatpush1.msra.mxu0 %v896
        %1026 = vmatprep.subr.mxu0 0.0
        %1027 = vmatpush1.msra.mxu0 %v897
        %1028 = vmatprep.subr.mxu0 0.0
        %1029 = vmatpush1.msra.mxu0 %v898
        %1030 = vmatprep.subr.mxu0 0.0
        %1031 = vmatpush1.msra.mxu0 %v899
        %1032 = vmatprep.subr.mxu0 0.0
        %1033 = vmatpush1.msra.mxu0 %v900
        %1034 = vmatprep.subr.mxu0 0.0
        %1035 = vmatpush1.msra.mxu0 %v901
        %1036 = vmatprep.subr.mxu0 0.0
        %1037 = vmatpush1.msra.mxu0 %v902
        %1038 = vmatprep.subr.mxu0 0.0
        %1039 = vmatpush1.msra.mxu0 %v903
        %1040 = vmatprep.subr.mxu0 0.0
        %1041 = vmatpush1.msra.mxu0 %v904
        %1042 = vmatprep.subr.mxu0 0.0
        %1043 = vmatpush1.msra.mxu0 %v905
        %1044 = vmatprep.subr.mxu0 0.0
        %1045 = vmatpush1.msra.mxu0 %v906
        %1046 = vmatprep.subr.mxu0 0.0
        %1047 = vmatpush1.msra.mxu0 %v907
        %1048 = vmatprep.subr.mxu0 0.0
        %1049 = vmatpush1.msra.mxu0 %v908
        %1050 = vmatprep.subr.mxu0 0.0
        %1051 = vmatpush1.msra.mxu0 %v909
        %1052 = vmatprep.subr.mxu0 0.0
        %1053 = vmatpush1.msra.mxu0 %v910
        %1054 = vmatprep.subr.mxu0 0.0
        %1055 = vmatpush1.msra.mxu0 %v911
        %1056 = vmatprep.subr.mxu0 0.0
        %1057 = vmatpush1.msra.mxu0 %v912
        %1058 = vmatprep.subr.mxu0 0.0
        %1059 = vmatpush1.msra.mxu0 %v913
        %1060 = vmatprep.subr.mxu0 0.0
        %1061 = vmatpush1.msra.mxu0 %v914
        %1062 = vmatprep.subr.mxu0 0.0
        %1063 = vmatpush1.msra.mxu0 %v915
        %1064 = vmatprep.subr.mxu0 0.0
        %1065 = vmatpush1.msra.mxu0 %v916
        %1066 = vmatprep.subr.mxu0 0.0
        %1067 = vmatpush1.msra.mxu0 %v917
        %1068 = vmatprep.subr.mxu0 0.0
        %1069 = vmatpush1.msra.mxu0 %v918
        %1070 = vmatprep.subr.mxu0 0.0
        %1071 = vmatpush1.msra.mxu0 %v919
        %1072 = vmatprep.subr.mxu0 0.0
        %1073 = vmatpush1.msra.mxu0 %v920
        %1074 = vmatprep.subr.mxu0 0.0
        %1075 = vmatpush1.msra.mxu0 %v921
        %1076 = vmatprep.subr.mxu0 0.0
        %1077 = vmatpush1.msra.mxu0 %v922
        %1078 = vmatprep.subr.mxu0 0.0
        %1079 = vmatpush1.msra.mxu0 %v923
        %1080 = vmatprep.mubr.f32.mxu0 %v847
        %1081 = vmatmul.mubr.f32.gmra.mrb[0].mxu0 %v846
        %v1082 = vpop.f32.mrb[0].mxu0
        %v1083 = vadd.f32 %v998, %v1082
        %v1084 = vpop.f32.mrb[0].mxu0
        %1085 = vmatprep.mubr.f32.mxu0 %v851
        %1086 = vmatmul.mubr.f32.gmra.mrb[0].mxu0 %v850
        %v1087 = vpop.f32.mrb[0].mxu0
        %v1088 = vadd.f32 %v1003, %v1087
        %v1089 = vpop.f32.mrb[0].mxu0
        %1090 = vmatprep.mubr.f32.mxu0 %v855
        %1091 = vmatmul.mubr.f32.gmra.mrb[0].mxu0 %v854
        %v1092 = vpop.f32.mrb[0].mxu0
        %v1093 = vadd.f32 %v1008, %v1092
        %v1094 = vpop.f32.mrb[0].mxu0
        %1095 = vmatprep.mubr.f32.mxu0 %v859
        %1096 = vmatmul.mubr.f32.gmra.mrb[0].mxu0 %v858
        %v1097 = vpop.f32.mrb[0].mxu0
        %v1098 = vadd.f32 %v1013, %v1097
        %v1099 = vpop.f32.mrb[0].mxu0
        %1100 = vdwg.mxu0
        %v1101 = vld [vmem:[%s8] sm:$0x1]
        %v1102 = vld [vmem:[%s7] sm:$0x1]
        %v1104 = vlaneseq
        %v1105 = vshrl.u32 %v1104, 7
        %v1106 = vsub.s32 0, %v1105
        %v1107 = vrot.slane %v1101, %v1106
        %v1109 = vmul.f32 %v1107, 0.0
        %v1110 = vadd.f32 %v1109, %v1083
        %v1112 = vlaneseq
        %v1113 = vshrl.u32 %v1112, 7
        %v1114 = vsub.s32 0, %v1113
        %v1115 = vrot.slane %v1102, %v1114
        %vm1117 = vcmp.ge.f32.partialorder %v1110, %v1115
        %v1118 = vsel %vm1117, 1, 0
        %v1119 = vcvt.s32.f32 %v1118
        %v1120 = vsub.f32 1.0, %v1119
        %v1121 = vmul.f32 %v1110, %v1120
        %v1122 = vadd.f32 %v1119, 0.0
        %v1123 = vmul.f32 %v1121, %v1107
        %v1124 = vadd.f32 %v1123, %v1088
        %vm1125 = vcmp.ge.f32.partialorder %v1124, %v1115
        %v1126 = vsel %vm1125, 1, 0
        %v1127 = vcvt.s32.f32 %v1126
        %v1128 = vsub.f32 1.0, %v1127
        %v1129 = vmul.f32 %v1124, %v1128
        %v1130 = vadd.f32 %v1122, %v1127
        %v1131 = vmul.f32 %v1129, %v1107
        %v1132 = vadd.f32 %v1131, %v1093
        %vm1133 = vcmp.ge.f32.partialorder %v1132, %v1115
        %v1134 = vsel %vm1133, 1, 0
        %v1135 = vcvt.s32.f32 %v1134
        %v1136 = vsub.f32 1.0, %v1135
        %v1137 = vmul.f32 %v1132, %v1136
        %v1138 = vadd.f32 %v1130, %v1135
        %v1139 = vmul.f32 %v1137, %v1107
        %v1140 = vadd.f32 %v1139, %v1098
        %vm1141 = vcmp.ge.f32.partialorder %v1140, %v1115
        %v1142 = vsel %vm1141, 1, 0
        %v1143 = vcvt.s32.f32 %v1142
        %v1144 = vadd.f32 %v1138, %v1143
        %1145 = vst [vmem:[%s379] sm:$0xff] %v1144
        %s1146 = sand.u32 %s229, 1
        %s1147 = scalar_lea.sflag [#allocation6], %s1146
        %s1148 = sand.u32 %s229, 1
        %s1149 = smul.addr %s1148, 8
        %s1150 = scalar_lea.vmem [#allocation10], %s1149
        // Predicated region
        $region69: #{tpu_custom_call.1} parent=55 // pred_check
          %p1151 = pneg %p239
        $region70: #{tpu_custom_call.1} parent=55 // pred_check_branch
          %1153 = sbr.rel (%p1151) target = $region72
        $region71: #{tpu_custom_call.1} parent=55 // pred_region
          %s1155 = ssub.s32 128, 128
          %1156 = vsyncadd %s1147, %s1155
          %s1157 = smul.addr %s27, 128
          %s1158 = scalar_lea.hbm %s9, %s1157
          %s1160 = sshll.u32 %s1150, 4
          %s1161 = int_to_ptr.vmem [resolvable:$true] %s1160
          %1163 = dma.vmem_to_hbm [thread:$0]  %s1161, 128, %s1158, %s1147
        $region72: #{tpu_custom_call.1} parent=55 // pred_fallthru
          _
      $region56: #{tpu_custom_call.1} parent=5 // pred_fallthru
        _
      %p1164 = scmp.le.s32.totalorder 2, %s22
      // Predicated region
      $region73: #{tpu_custom_call.1} parent=5 // pred_check
        %p1165 = pneg %p1164
      $region74: #{tpu_custom_call.1} parent=5 // pred_check_branch
        %1167 = sbr.rel (%p1165) target = $region76
      $region75: #{tpu_custom_call.1} parent=5 // pred_region
        %s1168 = ssub.s32 %s22, 2
        // Predicated region
        $region77: #{tpu_custom_call.1} parent=75 // pred_check
          %p1169 = pneg %p245
        $region78: #{tpu_custom_call.1} parent=75 // pred_check_branch
          %1171 = sbr.rel (%p1169) target = $region80
        $region79: #{tpu_custom_call.1} parent=75 // pred_region
          %s1172 = sand.u32 %s230, 1
          %s1173 = scalar_lea.sflag [#allocation6], %s1172
          %s1174 = sand.u32 %s230, 1
          %s1175 = smul.addr %s1174, 8
          %s1176 = scalar_lea.vmem [#allocation10], %s1175
          %1177 = dma.done %s1173, 128
        $region80: #{tpu_custom_call.1} parent=75 // pred_fallthru
          _
      $region76: #{tpu_custom_call.1} parent=5 // pred_fallthru
        _
    $region6: #{tpu_custom_call.1} parent=1 // loop_footer
      %s26 = sadd.s32 1, %s22
    $region7: #{tpu_custom_call.1} parent=1 // loop_footer_branch
      %21 = sbr.rel target = $region3
    $region8: #{tpu_custom_call.1} parent=1 // loop_exit
      _
    %1178 = vsyncpa [#allocation5], 1
    %s1179 = scalar_lea.sflag [#allocation5], 1
    %1180 = vsyncpa %s1179, 1
    %1181 = vsyncpa [#allocation8], 1
    %1182 = vsyncpa [#allocation6], 1
    %s1183 = scalar_lea.sflag [#allocation6], 1
    %1184 = vsyncpa %s1183, 1

</llo_original>
